<compile_context>
chip_gen: v7x
topology: tpu7x:2x2x1
jax: 0.10.0
libtpu: 0.0.40
codegen_flags: <defaults>
</compile_context>

<pallas_src>
import functools

import jax
import jax.numpy as jnp
from jax.experimental import pallas as pl
from jax.experimental.pallas import tpu as pltpu


VMEM_LIMIT_BYTES = 32 * 1024 * 1024   # explicit scoped-VMEM cap (safe on v5e/v6e/v7x)


# ----------------------------------------------------------------------------
# 3x3 "same" convolution: im2col + one bf16 MXU matmul per grid step (Nb samples)
# ----------------------------------------------------------------------------
def _conv3x3_kernel(x_ref, w_ref, o_ref, *, H, W):
    # x_ref: (Nb, H+2, W+2, Cin) bf16 (halved DMA); slice/concat in f32 for robust lowering.
    x = x_ref[...].astype(jnp.float32)
    Nb = x.shape[0]
    parts = []
    for dy in range(3):
        for dx in range(3):
            parts.append(x[:, dy:dy + H, dx:dx + W, :])       # static shifted slices
    patches = jnp.concatenate(parts, axis=-1)                 # (Nb, H, W, 9*Cin)
    lhs = patches.reshape(Nb * H * W, patches.shape[-1])      # free: merge leading dims
    lhs = lhs.astype(jnp.bfloat16)                            # bf16 operands, f32 accum
    acc = jnp.dot(lhs, w_ref[...], preferred_element_type=jnp.float32)   # (Nb*HW, Cout)
    o_ref[...] = acc.reshape(Nb, H * W, acc.shape[-1])        # free: split leading dim


def conv3x3_same(x_nchw, w_oihw):
    """x: (N, Cin, H, W), w: (Cout, Cin, 3, 3) -> (N, H*W, Cout) float32."""
    N, Cin, H, W = x_nchw.shape
    Cout = w_oihw.shape[0]
    HW = H * W

    # NHWC + spatial zero pad; store bf16 in HBM to halve the input DMA bytes.
    x_nhwc = jnp.transpose(x_nchw, (0, 2, 3, 1))
    x_pad = jnp.pad(x_nhwc, ((0, 0), (1, 1), (1, 1), (0, 0))).astype(jnp.bfloat16)
    # (Cout, Cin, 3, 3) -> (3, 3, Cin, Cout) -> (9*Cin, Cout), bf16 for the MXU.
    w2 = jnp.transpose(w_oihw, (2, 3, 1, 0)).reshape(9 * Cin, Cout).astype(jnp.bfloat16)

    # Batch samples per grid step so the matmul M dim is >= 256 and the ~0.35us/step
    # pipeline overhead is amortized.
    Nb = max(1, min(N, max(1, 256 // HW)))
    while N % Nb:
        Nb -= 1

    kern = functools.partial(_conv3x3_kernel, H=H, W=W)
    return pl.pallas_call(
        kern,
        out_shape=jax.ShapeDtypeStruct((N, HW, Cout), jnp.float32),
        grid=(N // Nb,),
        in_specs=[
            pl.BlockSpec((Nb, H + 2, W + 2, Cin), lambda n: (n, 0, 0, 0)),
            pl.BlockSpec((9 * Cin, Cout), lambda n: (0, 0)),
        ],
        out_specs=pl.BlockSpec((Nb, HW, Cout), lambda n: (n, 0, 0)),
        compiler_params=pltpu.CompilerParams(
            dimension_semantics=("parallel",),
            vmem_limit_bytes=VMEM_LIMIT_BYTES),
    )(x_pad, w2)


# ----------------------------------------------------------------------------
# BatchNorm2d (training-mode batch stats, biased variance), channel-tiled grid
# ----------------------------------------------------------------------------
def _bn_kernel(x_ref, g_ref, b_ref, o_ref, *, eps):
    x = x_ref[...]                                            # (B, 1, HW, OC)
    # stats over (batch, spatial) per channel; sequential single-axis means (equal groups)
    mean = jnp.mean(jnp.mean(x, axis=2, keepdims=True), axis=0, keepdims=True)
    d = x - mean
    var = jnp.mean(jnp.mean(d * d, axis=2, keepdims=True), axis=0, keepdims=True)
    xn = d * jax.lax.rsqrt(var + eps)
    o_ref[...] = xn * g_ref[...][None] + b_ref[...][None]


def batchnorm_train(u, gamma, beta, *, eps):
    """u: (B, I, HW, O*C); torch BN channel index = i*(O*C) + oc; stats over (B, HW)."""
    B, I, HW, OC = u.shape
    kern = functools.partial(_bn_kernel, eps=eps)
    return pl.pallas_call(
        kern,
        out_shape=jax.ShapeDtypeStruct((B, I, HW, OC), jnp.float32),
        grid=(I,),
        in_specs=[
            pl.BlockSpec((B, 1, HW, OC), lambda i: (0, i, 0, 0)),
            pl.BlockSpec((1, 1, OC), lambda i: (i, 0, 0)),
            pl.BlockSpec((1, 1, OC), lambda i: (i, 0, 0)),
        ],
        out_specs=pl.BlockSpec((B, 1, HW, OC), lambda i: (0, i, 0, 0)),
        compiler_params=pltpu.CompilerParams(
            dimension_semantics=("parallel",),
            vmem_limit_bytes=VMEM_LIMIT_BYTES),
    )(u, gamma.reshape(I, 1, OC), beta.reshape(I, 1, OC))


# ----------------------------------------------------------------------------
# Dynamic routing, tiled over the spatial (HW) axis; independent per pixel.
# ----------------------------------------------------------------------------
def _routing_kernel(u_ref, v_ref, *, num_routes, eps):
    u = u_ref[...]                                            # (B, I, O, C, tHW) f32
    B, I, O, C, tHW = u.shape
    # routing logits are shared across the batch (torch b_ij), kept as per-i (O, tHW) slabs
    b_logits = [jnp.zeros((O, tHW), jnp.float32) for _ in range(I)]
    v = None
    for it in range(num_routes):
        # softmax over the in-capsule axis, per (o, hw)
        bmax = b_logits[0]
        for i in range(1, I):
            bmax = jnp.maximum(bmax, b_logits[i])
        exps = [jnp.exp(b_logits[i] - bmax) for i in range(I)]
        denom = exps[0]
        for i in range(1, I):
            denom = denom + exps[i]
        inv_denom = pl.reciprocal(denom, approx=True)         # EUP, off the VALU path

        # s_j = sum_i c_ij * u_hat   (accumulated over I -> no (B,I,O,C,tHW) temporaries)
        s = jnp.zeros((B, O, C, tHW), jnp.float32)
        for i in range(I):
            c_i = (exps[i] * inv_denom)[None, :, None, :]     # (1, O, 1, tHW)
            s = s + c_i * u[:, i]

        # squash over out_channels; rsqrt/reciprocal on the EUP, eps avoids 0/0
        sq = jnp.sum(s * s, axis=2, keepdims=True)            # (B, O, 1, tHW)
        v = s * (sq * jax.lax.rsqrt(sq + eps)) * pl.reciprocal(1.0 + sq, approx=True)

        if it < num_routes - 1:
            inv_b = 1.0 / B
            for i in range(I):
                a_i = jnp.sum(u[:, i] * v, axis=2)            # (B, O, tHW) agreement
                b_logits[i] = b_logits[i] + jnp.sum(a_i, axis=0) * inv_b   # mean over batch
    v_ref[...] = v


def routing(u_t, num_routes, *, eps=1e-9):
    """u_t: (B, I, O, C, HWp) with HWp a multiple of 128 -> (B, O, C, HWp)."""
    B, I, O, C, HWp = u_t.shape
    tHW = 128
    for cand in (512, 256, 128):
        if HWp % cand == 0:
            tHW = cand
            break
    kern = functools.partial(_routing_kernel, num_routes=num_routes, eps=eps)
    return pl.pallas_call(
        kern,
        out_shape=jax.ShapeDtypeStruct((B, O, C, HWp), jnp.float32),
        grid=(HWp // tHW,),
        in_specs=[pl.BlockSpec((B, I, O, C, tHW), lambda h: (0, 0, 0, 0, h))],
        out_specs=pl.BlockSpec((B, O, C, tHW), lambda h: (0, 0, 0, h)),
        compiler_params=pltpu.CompilerParams(
            dimension_semantics=("parallel",),
            vmem_limit_bytes=VMEM_LIMIT_BYTES),
    )(u_t)


# ----------------------------------------------------------------------------
# Full forward
# ----------------------------------------------------------------------------
def conv_capsule_forward(x, conv_w, bn_gamma, bn_beta, *,
                         out_capsules, out_channels, num_routes=3,
                         batch_norm=True, bn_eps=1e-5):
    B, I, Cin, H, W = x.shape
    O, C = out_capsules, out_channels
    OC = O * C
    HW = H * W

    u = conv3x3_same(x.reshape(B * I, Cin, H, W), conv_w)     # (B*I, HW, OC) f32
    u = u.reshape(B, I, HW, OC)                               # free reshape

    if batch_norm:
        u = batchnorm_train(u, bn_gamma, bn_beta, eps=bn_eps)

    # single remaining layout shuffle to the routing layout (HW on lanes), plus a zero
    # pad of HW up to a multiple of 128 so routing tiles / stores are lane-dense.
    u_t = jnp.transpose(u.reshape(B, I, HW, O, C), (0, 1, 3, 4, 2))   # (B, I, O, C, HW)
    HWp = ((HW + 127) // 128) * 128
    if HWp != HW:
        u_t = jnp.pad(u_t, ((0, 0), (0, 0), (0, 0), (0, 0), (0, HWp - HW)))

    v = routing(u_t, num_routes)                              # (B, O, C, HWp)
    return v[..., :HW].reshape(B, O, C, H, W)                 # == v_j.permute(0,3,4,1,2)


# ----------------------------------------------------------------------------
# Pure-JAX reference (mirrors the torch forward); conv operands bf16-rounded to
# match the kernel's mixed precision (bf16 MXU with f32 accumulation).
# ----------------------------------------------------------------------------
def reference_forward(x, conv_w, gamma, beta, *, out_capsules, out_channels,
                      num_routes=3, bn_eps=1e-5):
    B, I, Cin, H, W = x.shape
    O, C = out_capsules, out_channels
    x_q = x.astype(jnp.bfloat16).astype(jnp.float32)
    w_q = conv_w.astype(jnp.bfloat16).astype(jnp.float32)
    x2 = x_q.reshape(B * I, Cin, H, W)
    u = jax.lax.conv_general_dilated(
        x2, w_q, (1, 1), "SAME",
        dimension_numbers=("NCHW", "OIHW", "NCHW"))           # (B*I, O*C, H, W)
    u = u.reshape(B, I * O * C, H, W)
    mean = jnp.mean(u, axis=(0, 2, 3), keepdims=True)
    var = jnp.mean((u - mean) ** 2, axis=(0, 2, 3), keepdims=True)
    u = (u - mean) * jax.lax.rsqrt(var + bn_eps)
    u = u * gamma.reshape(1, -1, 1, 1) + beta.reshape(1, -1, 1, 1)
    u = u.reshape(B, I, O * C, H, W)
    u_hat = jnp.transpose(u, (0, 1, 3, 4, 2)).reshape(B, I, H, W, O, C)

    b_ij = jnp.zeros((1, I, H, W, O), jnp.float32)
    v = None
    for it in range(num_routes):
        c = jax.nn.softmax(b_ij, axis=1)
        c = jnp.broadcast_to(c, (B, I, H, W, O))[..., None]
        s = jnp.sum(c * u_hat, axis=1, keepdims=True)
        sq = jnp.sum(s ** 2, axis=-1, keepdims=True)
        v = (sq * s / ((1.0 + sq) * jnp.sqrt(sq)))[:, 0]      # (B, H, W, O, C)
        if it < num_routes - 1:
            a = jnp.einsum("bihwoc,bhwoc->bihwo", u_hat, v)
            b_ij = b_ij + jnp.mean(a, axis=0, keepdims=True)
    return jnp.transpose(v, (0, 3, 4, 1, 2))                  # (B, O, C, H, W)


if __name__ == "__main__":
    # Small shapes consistent with the module's forward.
    B, in_caps, out_caps = 2, 4, 4
    in_ch, out_ch = 8, 8
    H = W = 8
    num_routes = 3

    key = jax.random.PRNGKey(0)
    kx, kw, kg, kb = jax.random.split(key, 4)

    x = jax.random.normal(kx, (B, in_caps, in_ch, H, W), jnp.float32)
    # conv2d weight: (out_channels*out_capsules, in_channels, 3, 3), no bias
    conv_w = jax.random.normal(kw, (out_ch * out_caps, in_ch, 3, 3), jnp.float32)
    conv_w = conv_w * jnp.sqrt(2.0 / (in_ch * 9))
    # BatchNorm2d(in_caps*out_caps*out_ch) affine params
    n_bn = in_caps * out_caps * out_ch
    bn_gamma = 1.0 + 0.1 * jax.random.normal(kg, (n_bn,), jnp.float32)
    bn_beta = 0.1 * jax.random.normal(kb, (n_bn,), jnp.float32)

    out = conv_capsule_forward(
        x, conv_w, bn_gamma, bn_beta,
        out_capsules=out_caps, out_channels=out_ch, num_routes=num_routes)
    out = jax.block_until_ready(out)

    ref = reference_forward(
        x, conv_w, bn_gamma, bn_beta,
        out_capsules=out_caps, out_channels=out_ch, num_routes=num_routes)
    ref = jax.block_until_ready(ref)

    assert out.shape == (B, out_caps, out_ch, H, W), out.shape
    assert bool(jnp.all(jnp.isfinite(out)))
    max_err = float(jnp.max(jnp.abs(out - ref)))
    assert bool(jnp.allclose(out, ref, atol=3e-3, rtol=3e-3)), max_err

    print("KERNEL_OK")
</pallas_src>

<mosaic_0001>
module attributes {stable_mosaic.version = 11 : i64} {
  func.func @_conv3x3_kernel(%arg0: i32, %arg1: memref<4x10x10x8xbf16, #tpu.memory_space<vmem>>, %arg2: memref<72x32xbf16, #tpu.memory_space<vmem>>, %arg3: memref<4x64x32xf32, #tpu.memory_space<vmem>>) attributes {dimension_semantics = [#tpu.dimension_semantics<parallel>], iteration_bounds = array<i64: 2>, scalar_prefetch = 0 : i64, scratch_operands = 0 : i64, tpu.core_type = #tpu.core_type<tc>, window_params = [{transform_indices = @transform_0, window_bounds = array<i64: 4, 10, 10, 8>}, {pipeline_mode = #tpu.pipeline_mode<synchronous>, transform_indices = @transform_1, window_bounds = array<i64: 72, 32>}, {transform_indices = @transform_2, window_bounds = array<i64: 4, 64, 32>}]} {
    %c0 = arith.constant 0 : index
    %c0_0 = arith.constant 0 : index
    %c0_1 = arith.constant 0 : index
    %c0_2 = arith.constant 0 : index
    %0 = vector.load %arg1[%c0, %c0_0, %c0_1, %c0_2] : memref<4x10x10x8xbf16, #tpu.memory_space<vmem>>, vector<4x10x10x8xbf16>
    %1 = arith.extf %0 : vector<4x10x10x8xbf16> to vector<4x10x10x8xf32>
    %2 = vector.extract_strided_slice %1 {offsets = [0, 0, 0, 0], sizes = [4, 8, 8, 8], strides = [1, 1, 1, 1]} : vector<4x10x10x8xf32> to vector<4x8x8x8xf32>
    %3 = vector.extract_strided_slice %1 {offsets = [0, 0, 1, 0], sizes = [4, 8, 8, 8], strides = [1, 1, 1, 1]} : vector<4x10x10x8xf32> to vector<4x8x8x8xf32>
    %4 = vector.extract_strided_slice %1 {offsets = [0, 0, 2, 0], sizes = [4, 8, 8, 8], strides = [1, 1, 1, 1]} : vector<4x10x10x8xf32> to vector<4x8x8x8xf32>
    %5 = vector.extract_strided_slice %1 {offsets = [0, 1, 0, 0], sizes = [4, 8, 8, 8], strides = [1, 1, 1, 1]} : vector<4x10x10x8xf32> to vector<4x8x8x8xf32>
    %6 = vector.extract_strided_slice %1 {offsets = [0, 1, 1, 0], sizes = [4, 8, 8, 8], strides = [1, 1, 1, 1]} : vector<4x10x10x8xf32> to vector<4x8x8x8xf32>
    %7 = vector.extract_strided_slice %1 {offsets = [0, 1, 2, 0], sizes = [4, 8, 8, 8], strides = [1, 1, 1, 1]} : vector<4x10x10x8xf32> to vector<4x8x8x8xf32>
    %8 = vector.extract_strided_slice %1 {offsets = [0, 2, 0, 0], sizes = [4, 8, 8, 8], strides = [1, 1, 1, 1]} : vector<4x10x10x8xf32> to vector<4x8x8x8xf32>
    %9 = vector.extract_strided_slice %1 {offsets = [0, 2, 1, 0], sizes = [4, 8, 8, 8], strides = [1, 1, 1, 1]} : vector<4x10x10x8xf32> to vector<4x8x8x8xf32>
    %10 = vector.extract_strided_slice %1 {offsets = [0, 2, 2, 0], sizes = [4, 8, 8, 8], strides = [1, 1, 1, 1]} : vector<4x10x10x8xf32> to vector<4x8x8x8xf32>
    %11 = tpu.concatenate %2, %3, %4, %5, %6, %7, %8, %9, %10 in 3 : vector<4x8x8x8xf32>, vector<4x8x8x8xf32>, vector<4x8x8x8xf32>, vector<4x8x8x8xf32>, vector<4x8x8x8xf32>, vector<4x8x8x8xf32>, vector<4x8x8x8xf32>, vector<4x8x8x8xf32>, vector<4x8x8x8xf32> -> vector<4x8x8x72xf32>
    %12 = vector.shape_cast %11 : vector<4x8x8x72xf32> to vector<256x72xf32>
    %13 = arith.truncf %12 : vector<256x72xf32> to vector<256x72xbf16>
    %c0_3 = arith.constant 0 : index
    %c0_4 = arith.constant 0 : index
    %14 = vector.load %arg2[%c0_3, %c0_4] : memref<72x32xbf16, #tpu.memory_space<vmem>>, vector<72x32xbf16>
    %cst = arith.constant dense<0.000000e+00> : vector<256x32xf32>
    %15 = tpu.matmul %13, %14, %cst {dimension_numbers = #tpu.dot_dimension_numbers<[1], [0], [0], [1], [0, 0, 1, 1], [], []>} : vector<256x72xbf16>, vector<72x32xbf16>, vector<256x32xf32> -> vector<256x32xf32>
    %16 = vector.shape_cast %15 : vector<256x32xf32> to vector<4x64x32xf32>
    %c0_5 = arith.constant 0 : index
    %c0_6 = arith.constant 0 : index
    %c0_7 = arith.constant 0 : index
    %17 = vector.load %arg3[%c0_5, %c0_6, %c0_7] : memref<4x64x32xf32, #tpu.memory_space<vmem>>, vector<4x64x32xf32>
    tpu.vector_store %arg3[%c0_5, %c0_6, %c0_7], %16 {strides = array<i32>} : memref<4x64x32xf32, #tpu.memory_space<vmem>>, vector<4x64x32xf32>,
    return
  }
  func.func @transform_0(%arg0: i32) -> (i32, i32, i32, i32) {
    %c0_i32 = arith.constant 0 : i32
    %c0_i32_0 = arith.constant 0 : i32
    %c0_i32_1 = arith.constant 0 : i32
    %c0_i32_2 = arith.constant 0 : i32
    return %arg0, %c0_i32, %c0_i32_0, %c0_i32_1 : i32, i32, i32, i32
  }
  func.func @transform_1(%arg0: i32) -> (i32, i32) {
    %c0_i32 = arith.constant 0 : i32
    %c0_i32_0 = arith.constant 0 : i32
    %c0_i32_1 = arith.constant 0 : i32
    return %c0_i32, %c0_i32_0 : i32, i32
  }
  func.func @transform_2(%arg0: i32) -> (i32, i32, i32) {
    %c0_i32 = arith.constant 0 : i32
    %c0_i32_0 = arith.constant 0 : i32
    %c0_i32_1 = arith.constant 0 : i32
    return %arg0, %c0_i32, %c0_i32_0 : i32, i32, i32
  }
}

</mosaic_0001>

<llo_original>
// kernel: tpu_custom_call.1
$region0: #{tpu_custom_call.1}
  #allocation0 [shape = 'u32[]', space=smem, size = 0x4, offset = 0x4, fixed_abs, tag = 'smem constant byte address 0x4 - core index']
  #allocation1 [shape = 'u32[144,128]{1,0:T(1,128)}', space=vmem, size = 0x12000, scoped, tag = 'internal scratch']
  %s0 = inlined_call_operand.vmem [shape: bf16[8,10,10,8], index: 0, kind: input, shape index: {}]
  %s1 = inlined_call_operand.vmem [shape: bf16[72,32], index: 1, kind: input, shape index: {}]
  %s2 = inlined_call_operand.vmem [shape: f32[8,64,32], index: 2, kind: output, shape index: {}]
  %s3 = sld [smem:[#allocation0]]
  $region41: #{tpu_custom_call.1} parent=0
    _
  %s5 = ssub.s32 1, %s3
  %s6 = scalar_select 0, %s5, %s3
  loop: start=0, step=1, limit=4
  $region2: #{tpu_custom_call.1} parent=0 // loop_pre_header
    _
  $region3: #{tpu_custom_call.1} parent=0 // loop_header
    %s8 = sphi 0, %s12
    %p9 = scmp.ge.s32.totalorder %s8, 4
    %s18 = sphi 0, %s20
    %s21 = sphi 0, %s18
    %s22 = sphi 0, %s21
    %s38 = sphi 0, %s22
    %s42 = sphi 0, %s42
    %s44 = sphi 0, %s42
    %s45 = sphi 0, %s44
    %s59 = sphi 0, %s45
    %s65 = sphi 0, %s67
    %s68 = sphi 0, %s65
    %s69 = sphi 0, %s68
    %s85 = sphi 0, %s69
  $region4: #{tpu_custom_call.1} parent=0 // loop_header_branch
    %11 = sbr.rel (%p9) target = $region8
  $region5: #{tpu_custom_call.1} parent=0 // loop_body
    %s13 = ssub.s32 %s8, 1
    %s14 = ssub.s32 %s8, 2
    %s15 = sadd.s32 %s8, 1
    %s16 = ssub.s32 %s8, %s15
    %p17 = scmp.eq.s32.totalorder %s16, 0
    %s19 = sadd.s32 %s18, 1
    %s20 = scalar_select %p17, %s18, %s19
    %p23 = pneg %p17
    %p24 = scmp.eq.s32.totalorder %s8, 1
    %p25 = por %p23, %p24
    %p26 = scmp.ne.s32.totalorder %s18, %s21
    %p27 = scmp.eq.s32.totalorder %s8, 0
    %p28 = por %p26, %p27
    %p29 = scmp.ne.s32.totalorder %s18, %s21
    %p30 = scmp.eq.s32.totalorder %s13, 1
    %p31 = por %p29, %p30
    %p32 = scmp.ne.s32.totalorder %s21, %s22
    %p33 = scmp.eq.s32.totalorder %s13, 0
    %p34 = por %p32, %p33
    %p35 = scmp.ne.s32.totalorder %s21, %s22
    %p36 = scmp.eq.s32.totalorder %s14, 1
    %p37 = por %p35, %p36
    %p39 = scmp.ne.s32.totalorder %s22, %s38
    %p40 = scmp.eq.s32.totalorder %s14, 0
    %p41 = por %p39, %p40
    %s43 = sadd.s32 %s42, 1
    %p46 = scmp.eq.s32.totalorder %s8, 1
    %p47 = scmp.ne.s32.totalorder %s42, %s44
    %p48 = scmp.eq.s32.totalorder %s8, 0
    %p49 = por %p47, %p48
    %p50 = scmp.ne.s32.totalorder %s42, %s44
    %p51 = scmp.eq.s32.totalorder %s13, 1
    %p52 = por %p50, %p51
    %p53 = scmp.ne.s32.totalorder %s44, %s45
    %p54 = scmp.eq.s32.totalorder %s13, 0
    %p55 = por %p53, %p54
    %p56 = scmp.ne.s32.totalorder %s44, %s45
    %p57 = scmp.eq.s32.totalorder %s14, 1
    %p58 = por %p56, %p57
    %p60 = scmp.ne.s32.totalorder %s45, %s59
    %p61 = scmp.eq.s32.totalorder %s14, 0
    %p62 = por %p60, %p61
    %s63 = ssub.s32 %s8, %s15
    %p64 = scmp.eq.s32.totalorder %s63, 0
    %s66 = sadd.s32 %s65, 1
    %s67 = scalar_select %p64, %s65, %s66
    %p70 = pneg %p64
    %p71 = scmp.eq.s32.totalorder %s8, 1
    %p72 = por %p70, %p71
    %p73 = scmp.ne.s32.totalorder %s65, %s68
    %p74 = scmp.eq.s32.totalorder %s8, 0
    %p75 = por %p73, %p74
    %p76 = scmp.ne.s32.totalorder %s65, %s68
    %p77 = scmp.eq.s32.totalorder %s13, 1
    %p78 = por %p76, %p77
    %p79 = scmp.ne.s32.totalorder %s68, %s69
    %p80 = scmp.eq.s32.totalorder %s13, 0
    %p81 = por %p79, %p80
    %p82 = scmp.ne.s32.totalorder %s68, %s69
    %p83 = scmp.eq.s32.totalorder %s14, 1
    %p84 = por %p82, %p83
    %p86 = scmp.ne.s32.totalorder %s69, %s85
    %p87 = scmp.eq.s32.totalorder %s14, 0
    %p88 = por %p86, %p87
    %p89 = scmp.le.s32.totalorder 1, %s8
    %p90 = scmp.lt.s32.totalorder %s8, 3
    %p91 = pnand %p89, %p90
    %p92 = pneg %p91
    // Predicated region
    $region9: #{tpu_custom_call.1} parent=5 // pred_check
      _
    $region10: #{tpu_custom_call.1} parent=5 // pred_check_branch
      %94 = sbr.rel (%p91) target = $region12
    $region11: #{tpu_custom_call.1} parent=5 // pred_region
      %s95 = ssub.s32 %s8, 1
      // Predicated region
      $region13: #{tpu_custom_call.1} parent=11 // pred_check
        %p96 = pneg %p55
      $region14: #{tpu_custom_call.1} parent=11 // pred_check_branch
        %98 = sbr.rel (%p96) target = $region16
      $region15: #{tpu_custom_call.1} parent=11 // pred_region
        _
      $region16: #{tpu_custom_call.1} parent=11 // pred_fallthru
        _
    $region12: #{tpu_custom_call.1} parent=5 // pred_fallthru
      _
    %p99 = scmp.lt.s32.totalorder %s8, 2
    // Predicated region
    $region17: #{tpu_custom_call.1} parent=5 // pred_check
      %p100 = pneg %p99
    $region18: #{tpu_custom_call.1} parent=5 // pred_check_branch
      %102 = sbr.rel (%p100) target = $region20
    $region19: #{tpu_custom_call.1} parent=5 // pred_region
      // Predicated region
      $region21: #{tpu_custom_call.1} parent=19 // pred_check
        %p103 = pneg %p28
      $region22: #{tpu_custom_call.1} parent=19 // pred_check_branch
        %105 = sbr.rel (%p103) target = $region24
      $region23: #{tpu_custom_call.1} parent=19 // pred_region
        %s106 = smul.u32 4, %s8
        %p107 = scmp.lt.s32.totalorder %s106, 7
        %s108 = scalar_select %p107, %s106, 7
        %s109 = smul.addr %s108, 20
        %s110 = smul.addr %s109, 4
        %s111 = scalar_lea.vmem %s0, %s110
        %s112 = smul.u32 4, %s8
      $region24: #{tpu_custom_call.1} parent=19 // pred_fallthru
        _
    $region20: #{tpu_custom_call.1} parent=5 // pred_fallthru
      _
    %p113 = scmp.le.s32.totalorder 1, %s8
    %p114 = scmp.lt.s32.totalorder %s8, 3
    %p115 = pnand %p113, %p114
    %p116 = pneg %p115
    // Predicated region
    $region25: #{tpu_custom_call.1} parent=5 // pred_check
      _
    $region26: #{tpu_custom_call.1} parent=5 // pred_check_branch
      %118 = sbr.rel (%p115) target = $region28
    $region27: #{tpu_custom_call.1} parent=5 // pred_region
      %s119 = ssub.s32 %s8, 1
      %s120 = smul.u32 4, %s13
      %p121 = scmp.lt.s32.totalorder %s120, 7
      %s122 = scalar_select %p121, %s120, 7
      %s123 = smul.addr %s122, 20
      %s124 = smul.addr %s123, 4
      %s125 = scalar_lea.vmem %s0, %s124
      %p126 = pneg %p34
      %p127 = pneg %p31
      %p128 = pneg %p55
      %p129 = pneg %p52
      %p130 = pneg %p81
      %p131 = pneg %p78
      %s132 = smul.u32 4, %s13
      %p133 = scmp.lt.s32.totalorder %s132, 7
      %s134 = scalar_select %p133, %s132, 7
      %s135 = smul.addr %s134, 8
      %s136 = smul.addr %s135, 8
      %s137 = scalar_lea.vmem %s2, %s136
      %s138 = smul.u32 4, %s13
      %p139 = scmp.lt.s32.totalorder %s138, 7
      %s140 = scalar_select %p139, %s138, 7
      %s141 = smul.addr %s140, 20
      %s142 = smul.addr %s141, 4
      %s143 = scalar_lea.vmem %s0, %s142
      %s144 = smul.u32 4, %s13
      %s145 = smul.u32 4, %s13
      %p146 = scmp.lt.s32.totalorder %s145, 7
      %s147 = scalar_select %p146, %s145, 7
      %s148 = smul.addr %s147, 8
      %s149 = smul.addr %s148, 8
      %s150 = scalar_lea.vmem %s2, %s149
      %s151 = smul.u32 4, %s13
      %v153 = vld [vmem:[%s143] sm:$0xf]
      %v154 = vld [vmem:[%s143 + $0x4] sm:$0x1]
      %v155 = vld [vmem:[%s143 + $0x8] sm:$0xf]
      %v156 = vld [vmem:[%s143 + $0xc] sm:$0x1]
      %v157 = vld [vmem:[%s143 + $0x10] sm:$0xf]
      %v158 = vld [vmem:[%s143 + $0x14] sm:$0x1]
      %v159 = vld [vmem:[%s143 + $0x18] sm:$0xf]
      %v160 = vld [vmem:[%s143 + $0x1c] sm:$0x1]
      %v161 = vld [vmem:[%s143 + $0x20] sm:$0xf]
      %v162 = vld [vmem:[%s143 + $0x24] sm:$0x1]
      %v163 = vld [vmem:[%s143 + $0x28] sm:$0xf]
      %v164 = vld [vmem:[%s143 + $0x2c] sm:$0x1]
      %v165 = vld [vmem:[%s143 + $0x30] sm:$0xf]
      %v166 = vld [vmem:[%s143 + $0x34] sm:$0x1]
      %v167 = vld [vmem:[%s143 + $0x38] sm:$0xf]
      %v168 = vld [vmem:[%s143 + $0x3c] sm:$0x1]
      %v169 = vld [vmem:[%s143 + $0x40] sm:$0xf]
      %v170 = vld [vmem:[%s143 + $0x44] sm:$0x1]
      %v171 = vld [vmem:[%s143 + $0x48] sm:$0xf]
      %v172 = vld [vmem:[%s143 + $0x4c] sm:$0x1]
      %v173 = vld [vmem:[%s143 + $0x50] sm:$0xf]
      %v174 = vld [vmem:[%s143 + $0x54] sm:$0x1]
      %v175 = vld [vmem:[%s143 + $0x58] sm:$0xf]
      %v176 = vld [vmem:[%s143 + $0x5c] sm:$0x1]
      %v177 = vld [vmem:[%s143 + $0x60] sm:$0xf]
      %v178 = vld [vmem:[%s143 + $0x64] sm:$0x1]
      %v179 = vld [vmem:[%s143 + $0x68] sm:$0xf]
      %v180 = vld [vmem:[%s143 + $0x6c] sm:$0x1]
      %v181 = vld [vmem:[%s143 + $0x70] sm:$0xf]
      %v182 = vld [vmem:[%s143 + $0x74] sm:$0x1]
      %v183 = vld [vmem:[%s143 + $0x78] sm:$0xf]
      %v184 = vld [vmem:[%s143 + $0x7c] sm:$0x1]
      %v185 = vld [vmem:[%s143 + $0x80] sm:$0xf]
      %v186 = vld [vmem:[%s143 + $0x84] sm:$0x1]
      %v187 = vld [vmem:[%s143 + $0x88] sm:$0xf]
      %v188 = vld [vmem:[%s143 + $0x8c] sm:$0x1]
      %v189 = vld [vmem:[%s143 + $0x90] sm:$0xf]
      %v190 = vld [vmem:[%s143 + $0x94] sm:$0x1]
      %v191 = vld [vmem:[%s143 + $0x98] sm:$0xf]
      %v192 = vld [vmem:[%s143 + $0x9c] sm:$0x1]
      %v193 = vld [vmem:[%s143 + $0xa0] sm:$0xf]
      %v194 = vld [vmem:[%s143 + $0xa4] sm:$0x1]
      %v195 = vld [vmem:[%s143 + $0xa8] sm:$0xf]
      %v196 = vld [vmem:[%s143 + $0xac] sm:$0x1]
      %v197 = vld [vmem:[%s143 + $0xb0] sm:$0xf]
      %v198 = vld [vmem:[%s143 + $0xb4] sm:$0x1]
      %v199 = vld [vmem:[%s143 + $0xb8] sm:$0xf]
      %v200 = vld [vmem:[%s143 + $0xbc] sm:$0x1]
      %v201 = vld [vmem:[%s143 + $0xc0] sm:$0xf]
      %v202 = vld [vmem:[%s143 + $0xc4] sm:$0x1]
      %v203 = vld [vmem:[%s143 + $0xc8] sm:$0xf]
      %v204 = vld [vmem:[%s143 + $0xcc] sm:$0x1]
      %v205 = vld [vmem:[%s143 + $0xd0] sm:$0xf]
      %v206 = vld [vmem:[%s143 + $0xd4] sm:$0x1]
      %v207 = vld [vmem:[%s143 + $0xd8] sm:$0xf]
      %v208 = vld [vmem:[%s143 + $0xdc] sm:$0x1]
      %v209 = vld [vmem:[%s143 + $0xe0] sm:$0xf]
      %v210 = vld [vmem:[%s143 + $0xe4] sm:$0x1]
      %v211 = vld [vmem:[%s143 + $0xe8] sm:$0xf]
      %v212 = vld [vmem:[%s143 + $0xec] sm:$0x1]
      %v213 = vld [vmem:[%s143 + $0xf0] sm:$0xf]
      %v214 = vld [vmem:[%s143 + $0xf4] sm:$0x1]
      %v215 = vld [vmem:[%s143 + $0xf8] sm:$0xf]
      %v216 = vld [vmem:[%s143 + $0xfc] sm:$0x1]
      %v217 = vld [vmem:[%s143 + $0x100] sm:$0xf]
      %v218 = vld [vmem:[%s143 + $0x104] sm:$0x1]
      %v219 = vld [vmem:[%s143 + $0x108] sm:$0xf]
      %v220 = vld [vmem:[%s143 + $0x10c] sm:$0x1]
      %v221 = vld [vmem:[%s143 + $0x110] sm:$0xf]
      %v222 = vld [vmem:[%s143 + $0x114] sm:$0x1]
      %v223 = vld [vmem:[%s143 + $0x118] sm:$0xf]
      %v224 = vld [vmem:[%s143 + $0x11c] sm:$0x1]
      %v225 = vld [vmem:[%s143 + $0x120] sm:$0xf]
      %v226 = vld [vmem:[%s143 + $0x124] sm:$0x1]
      %v227 = vld [vmem:[%s143 + $0x128] sm:$0xf]
      %v228 = vld [vmem:[%s143 + $0x12c] sm:$0x1]
      %v229 = vld [vmem:[%s143 + $0x130] sm:$0xf]
      %v230 = vld [vmem:[%s143 + $0x134] sm:$0x1]
      %v231 = vld [vmem:[%s143 + $0x138] sm:$0xf]
      %v232 = vld [vmem:[%s143 + $0x13c] sm:$0x1]
      %v233 = vunpack.c.l.bf16 %v153
      %v234 = vunpack.c.l.bf16 %v154
      %v235 = vunpack.c.l.bf16 %v155
      %v236 = vunpack.c.l.bf16 %v156
      %v237 = vunpack.c.l.bf16 %v157
      %v238 = vunpack.c.l.bf16 %v158
      %v239 = vunpack.c.l.bf16 %v159
      %v240 = vunpack.c.l.bf16 %v160
      %v241 = vunpack.c.l.bf16 %v161
      %v242 = vunpack.c.l.bf16 %v162
      %v243 = vunpack.c.l.bf16 %v163
      %v244 = vunpack.c.l.bf16 %v164
      %v245 = vunpack.c.l.bf16 %v165
      %v246 = vunpack.c.l.bf16 %v166
      %v247 = vunpack.c.l.bf16 %v167
      %v248 = vunpack.c.l.bf16 %v168
      %v249 = vunpack.c.l.bf16 %v169
      %v250 = vunpack.c.l.bf16 %v170
      %v251 = vunpack.c.l.bf16 %v171
      %v252 = vunpack.c.l.bf16 %v172
      %v253 = vunpack.c.l.bf16 %v173
      %v254 = vunpack.c.l.bf16 %v174
      %v255 = vunpack.c.l.bf16 %v175
      %v256 = vunpack.c.l.bf16 %v176
      %v257 = vunpack.c.l.bf16 %v177
      %v258 = vunpack.c.l.bf16 %v178
      %v259 = vunpack.c.l.bf16 %v179
      %v260 = vunpack.c.l.bf16 %v180
      %v261 = vunpack.c.l.bf16 %v181
      %v262 = vunpack.c.l.bf16 %v182
      %v263 = vunpack.c.l.bf16 %v183
      %v264 = vunpack.c.l.bf16 %v184
      %v265 = vunpack.c.l.bf16 %v185
      %v266 = vunpack.c.l.bf16 %v186
      %v267 = vunpack.c.l.bf16 %v187
      %v268 = vunpack.c.l.bf16 %v188
      %v269 = vunpack.c.l.bf16 %v189
      %v270 = vunpack.c.l.bf16 %v190
      %v271 = vunpack.c.l.bf16 %v191
      %v272 = vunpack.c.l.bf16 %v192
      %v273 = vunpack.c.l.bf16 %v193
      %v274 = vunpack.c.l.bf16 %v194
      %v275 = vunpack.c.l.bf16 %v195
      %v276 = vunpack.c.l.bf16 %v196
      %v277 = vunpack.c.l.bf16 %v197
      %v278 = vunpack.c.l.bf16 %v198
      %v279 = vunpack.c.l.bf16 %v199
      %v280 = vunpack.c.l.bf16 %v200
      %v281 = vunpack.c.l.bf16 %v201
      %v282 = vunpack.c.l.bf16 %v202
      %v283 = vunpack.c.l.bf16 %v203
      %v284 = vunpack.c.l.bf16 %v204
      %v285 = vunpack.c.l.bf16 %v205
      %v286 = vunpack.c.l.bf16 %v206
      %v287 = vunpack.c.l.bf16 %v207
      %v288 = vunpack.c.l.bf16 %v208
      %v289 = vunpack.c.l.bf16 %v209
      %v290 = vunpack.c.l.bf16 %v210
      %v291 = vunpack.c.l.bf16 %v211
      %v292 = vunpack.c.l.bf16 %v212
      %v293 = vunpack.c.l.bf16 %v213
      %v294 = vunpack.c.l.bf16 %v214
      %v295 = vunpack.c.l.bf16 %v215
      %v296 = vunpack.c.l.bf16 %v216
      %v297 = vunpack.c.l.bf16 %v217
      %v298 = vunpack.c.l.bf16 %v218
      %v299 = vunpack.c.l.bf16 %v219
      %v300 = vunpack.c.l.bf16 %v220
      %v301 = vunpack.c.l.bf16 %v221
      %v302 = vunpack.c.l.bf16 %v222
      %v303 = vunpack.c.l.bf16 %v223
      %v304 = vunpack.c.l.bf16 %v224
      %v305 = vunpack.c.l.bf16 %v225
      %v306 = vunpack.c.l.bf16 %v226
      %v307 = vunpack.c.l.bf16 %v227
      %v308 = vunpack.c.l.bf16 %v228
      %v309 = vunpack.c.l.bf16 %v229
      %v310 = vunpack.c.l.bf16 %v230
      %v311 = vunpack.c.l.bf16 %v231
      %v312 = vunpack.c.l.bf16 %v232
      %vm377 = vcmask 1046528
      %v378 = vrot.slane %v233, 1
      %v379 = vrot.slane %v234, 1
      %v380 = vsel %vm377, %v378, %v379
      %v381 = vrot.slane %v235, 1
      %v382 = vrot.slane %v236, 1
      %v383 = vsel %vm377, %v381, %v382
      %v384 = vrot.slane %v237, 1
      %v385 = vrot.slane %v238, 1
      %v386 = vsel %vm377, %v384, %v385
      %v387 = vrot.slane %v239, 1
      %v388 = vrot.slane %v240, 1
      %v389 = vsel %vm377, %v387, %v388
      %v390 = vrot.slane %v241, 1
      %v391 = vrot.slane %v242, 1
      %v392 = vsel %vm377, %v390, %v391
      %v393 = vrot.slane %v243, 1
      %v394 = vrot.slane %v244, 1
      %v395 = vsel %vm377, %v393, %v394
      %v396 = vrot.slane %v245, 1
      %v397 = vrot.slane %v246, 1
      %v398 = vsel %vm377, %v396, %v397
      %v399 = vrot.slane %v247, 1
      %v400 = vrot.slane %v248, 1
      %v401 = vsel %vm377, %v399, %v400
      %v402 = vrot.slane %v253, 1
      %v403 = vrot.slane %v254, 1
      %v404 = vsel %vm377, %v402, %v403
      %v405 = vrot.slane %v255, 1
      %v406 = vrot.slane %v256, 1
      %v407 = vsel %vm377, %v405, %v406
      %v408 = vrot.slane %v257, 1
      %v409 = vrot.slane %v258, 1
      %v410 = vsel %vm377, %v408, %v409
      %v411 = vrot.slane %v259, 1
      %v412 = vrot.slane %v260, 1
      %v413 = vsel %vm377, %v411, %v412
      %v414 = vrot.slane %v261, 1
      %v415 = vrot.slane %v262, 1
      %v416 = vsel %vm377, %v414, %v415
      %v417 = vrot.slane %v263, 1
      %v418 = vrot.slane %v264, 1
      %v419 = vsel %vm377, %v417, %v418
      %v420 = vrot.slane %v265, 1
      %v421 = vrot.slane %v266, 1
      %v422 = vsel %vm377, %v420, %v421
      %v423 = vrot.slane %v267, 1
      %v424 = vrot.slane %v268, 1
      %v425 = vsel %vm377, %v423, %v424
      %v426 = vrot.slane %v273, 1
      %v427 = vrot.slane %v274, 1
      %v428 = vsel %vm377, %v426, %v427
      %v429 = vrot.slane %v275, 1
      %v430 = vrot.slane %v276, 1
      %v431 = vsel %vm377, %v429, %v430
      %v432 = vrot.slane %v277, 1
      %v433 = vrot.slane %v278, 1
      %v434 = vsel %vm377, %v432, %v433
      %v435 = vrot.slane %v279, 1
      %v436 = vrot.slane %v280, 1
      %v437 = vsel %vm377, %v435, %v436
      %v438 = vrot.slane %v281, 1
      %v439 = vrot.slane %v282, 1
      %v440 = vsel %vm377, %v438, %v439
      %v441 = vrot.slane %v283, 1
      %v442 = vrot.slane %v284, 1
      %v443 = vsel %vm377, %v441, %v442
      %v444 = vrot.slane %v285, 1
      %v445 = vrot.slane %v286, 1
      %v446 = vsel %vm377, %v444, %v445
      %v447 = vrot.slane %v287, 1
      %v448 = vrot.slane %v288, 1
      %v449 = vsel %vm377, %v447, %v448
      %v450 = vrot.slane %v293, 1
      %v451 = vrot.slane %v294, 1
      %v452 = vsel %vm377, %v450, %v451
      %v453 = vrot.slane %v295, 1
      %v454 = vrot.slane %v296, 1
      %v455 = vsel %vm377, %v453, %v454
      %v456 = vrot.slane %v297, 1
      %v457 = vrot.slane %v298, 1
      %v458 = vsel %vm377, %v456, %v457
      %v459 = vrot.slane %v299, 1
      %v460 = vrot.slane %v300, 1
      %v461 = vsel %vm377, %v459, %v460
      %v462 = vrot.slane %v301, 1
      %v463 = vrot.slane %v302, 1
      %v464 = vsel %vm377, %v462, %v463
      %v465 = vrot.slane %v303, 1
      %v466 = vrot.slane %v304, 1
      %v467 = vsel %vm377, %v465, %v466
      %v468 = vrot.slane %v305, 1
      %v469 = vrot.slane %v306, 1
      %v470 = vsel %vm377, %v468, %v469
      %v471 = vrot.slane %v307, 1
      %v472 = vrot.slane %v308, 1
      %v473 = vsel %vm377, %v471, %v472
      %474 = vrot.lane.b32.xlu0 %v380, 8
      %v475 = vpop.permute.xlu0 %474
      %476 = vrot.lane.b32.xlu0 %v383, 8
      %v477 = vpop.permute.xlu0 %476
      %478 = vrot.lane.b32.xlu0 %v386, 8
      %v479 = vpop.permute.xlu0 %478
      %480 = vrot.lane.b32.xlu0 %v389, 8
      %v481 = vpop.permute.xlu0 %480
      %482 = vrot.lane.b32.xlu0 %v392, 8
      %v483 = vpop.permute.xlu0 %482
      %484 = vrot.lane.b32.xlu0 %v395, 8
      %v485 = vpop.permute.xlu0 %484
      %486 = vrot.lane.b32.xlu0 %v398, 8
      %v487 = vpop.permute.xlu0 %486
      %488 = vrot.lane.b32.xlu0 %v401, 8
      %v489 = vpop.permute.xlu0 %488
      %490 = vrot.lane.b32.xlu0 %v404, 8
      %v491 = vpop.permute.xlu0 %490
      %492 = vrot.lane.b32.xlu0 %v407, 8
      %v493 = vpop.permute.xlu0 %492
      %494 = vrot.lane.b32.xlu0 %v410, 8
      %v495 = vpop.permute.xlu0 %494
      %496 = vrot.lane.b32.xlu0 %v413, 8
      %v497 = vpop.permute.xlu0 %496
      %498 = vrot.lane.b32.xlu0 %v416, 8
      %v499 = vpop.permute.xlu0 %498
      %500 = vrot.lane.b32.xlu0 %v419, 8
      %v501 = vpop.permute.xlu0 %500
      %502 = vrot.lane.b32.xlu0 %v422, 8
      %v503 = vpop.permute.xlu0 %502
      %504 = vrot.lane.b32.xlu0 %v425, 8
      %v505 = vpop.permute.xlu0 %504
      %506 = vrot.lane.b32.xlu0 %v428, 8
      %v507 = vpop.permute.xlu0 %506
      %508 = vrot.lane.b32.xlu0 %v431, 8
      %v509 = vpop.permute.xlu0 %508
      %510 = vrot.lane.b32.xlu0 %v434, 8
      %v511 = vpop.permute.xlu0 %510
      %512 = vrot.lane.b32.xlu0 %v437, 8
      %v513 = vpop.permute.xlu0 %512
      %514 = vrot.lane.b32.xlu0 %v440, 8
      %v515 = vpop.permute.xlu0 %514
      %516 = vrot.lane.b32.xlu0 %v443, 8
      %v517 = vpop.permute.xlu0 %516
      %518 = vrot.lane.b32.xlu0 %v446, 8
      %v519 = vpop.permute.xlu0 %518
      %520 = vrot.lane.b32.xlu0 %v449, 8
      %v521 = vpop.permute.xlu0 %520
      %522 = vrot.lane.b32.xlu0 %v452, 8
      %v523 = vpop.permute.xlu0 %522
      %524 = vrot.lane.b32.xlu0 %v455, 8
      %v525 = vpop.permute.xlu0 %524
      %526 = vrot.lane.b32.xlu0 %v458, 8
      %v527 = vpop.permute.xlu0 %526
      %528 = vrot.lane.b32.xlu0 %v461, 8
      %v529 = vpop.permute.xlu0 %528
      %530 = vrot.lane.b32.xlu0 %v464, 8
      %v531 = vpop.permute.xlu0 %530
      %532 = vrot.lane.b32.xlu0 %v467, 8
      %v533 = vpop.permute.xlu0 %532
      %534 = vrot.lane.b32.xlu0 %v470, 8
      %v535 = vpop.permute.xlu0 %534
      %536 = vrot.lane.b32.xlu0 %v473, 8
      %v537 = vpop.permute.xlu0 %536
      %vm570 = vcmask 1045504
      %v571 = vrot.slane %v233, 2
      %v572 = vrot.slane %v234, 2
      %v573 = vsel %vm570, %v571, %v572
      %v574 = vrot.slane %v235, 2
      %v575 = vrot.slane %v236, 2
      %v576 = vsel %vm570, %v574, %v575
      %v577 = vrot.slane %v237, 2
      %v578 = vrot.slane %v238, 2
      %v579 = vsel %vm570, %v577, %v578
      %v580 = vrot.slane %v239, 2
      %v581 = vrot.slane %v240, 2
      %v582 = vsel %vm570, %v580, %v581
      %v583 = vrot.slane %v241, 2
      %v584 = vrot.slane %v242, 2
      %v585 = vsel %vm570, %v583, %v584
      %v586 = vrot.slane %v243, 2
      %v587 = vrot.slane %v244, 2
      %v588 = vsel %vm570, %v586, %v587
      %v589 = vrot.slane %v245, 2
      %v590 = vrot.slane %v246, 2
      %v591 = vsel %vm570, %v589, %v590
      %v592 = vrot.slane %v247, 2
      %v593 = vrot.slane %v248, 2
      %v594 = vsel %vm570, %v592, %v593
      %v595 = vrot.slane %v253, 2
      %v596 = vrot.slane %v254, 2
      %v597 = vsel %vm570, %v595, %v596
      %v598 = vrot.slane %v255, 2
      %v599 = vrot.slane %v256, 2
      %v600 = vsel %vm570, %v598, %v599
      %v601 = vrot.slane %v257, 2
      %v602 = vrot.slane %v258, 2
      %v603 = vsel %vm570, %v601, %v602
      %v604 = vrot.slane %v259, 2
      %v605 = vrot.slane %v260, 2
      %v606 = vsel %vm570, %v604, %v605
      %v607 = vrot.slane %v261, 2
      %v608 = vrot.slane %v262, 2
      %v609 = vsel %vm570, %v607, %v608
      %v610 = vrot.slane %v263, 2
      %v611 = vrot.slane %v264, 2
      %v612 = vsel %vm570, %v610, %v611
      %v613 = vrot.slane %v265, 2
      %v614 = vrot.slane %v266, 2
      %v615 = vsel %vm570, %v613, %v614
      %v616 = vrot.slane %v267, 2
      %v617 = vrot.slane %v268, 2
      %v618 = vsel %vm570, %v616, %v617
      %v619 = vrot.slane %v273, 2
      %v620 = vrot.slane %v274, 2
      %v621 = vsel %vm570, %v619, %v620
      %v622 = vrot.slane %v275, 2
      %v623 = vrot.slane %v276, 2
      %v624 = vsel %vm570, %v622, %v623
      %v625 = vrot.slane %v277, 2
      %v626 = vrot.slane %v278, 2
      %v627 = vsel %vm570, %v625, %v626
      %v628 = vrot.slane %v279, 2
      %v629 = vrot.slane %v280, 2
      %v630 = vsel %vm570, %v628, %v629
      %v631 = vrot.slane %v281, 2
      %v632 = vrot.slane %v282, 2
      %v633 = vsel %vm570, %v631, %v632
      %v634 = vrot.slane %v283, 2
      %v635 = vrot.slane %v284, 2
      %v636 = vsel %vm570, %v634, %v635
      %v637 = vrot.slane %v285, 2
      %v638 = vrot.slane %v286, 2
      %v639 = vsel %vm570, %v637, %v638
      %v640 = vrot.slane %v287, 2
      %v641 = vrot.slane %v288, 2
      %v642 = vsel %vm570, %v640, %v641
      %v643 = vrot.slane %v293, 2
      %v644 = vrot.slane %v294, 2
      %v645 = vsel %vm570, %v643, %v644
      %v646 = vrot.slane %v295, 2
      %v647 = vrot.slane %v296, 2
      %v648 = vsel %vm570, %v646, %v647
      %v649 = vrot.slane %v297, 2
      %v650 = vrot.slane %v298, 2
      %v651 = vsel %vm570, %v649, %v650
      %v652 = vrot.slane %v299, 2
      %v653 = vrot.slane %v300, 2
      %v654 = vsel %vm570, %v652, %v653
      %v655 = vrot.slane %v301, 2
      %v656 = vrot.slane %v302, 2
      %v657 = vsel %vm570, %v655, %v656
      %v658 = vrot.slane %v303, 2
      %v659 = vrot.slane %v304, 2
      %v660 = vsel %vm570, %v658, %v659
      %v661 = vrot.slane %v305, 2
      %v662 = vrot.slane %v306, 2
      %v663 = vsel %vm570, %v661, %v662
      %v664 = vrot.slane %v307, 2
      %v665 = vrot.slane %v308, 2
      %v666 = vsel %vm570, %v664, %v665
      %667 = vrot.lane.b32.xlu0 %v573, 16
      %v668 = vpop.permute.xlu0 %667
      %669 = vrot.lane.b32.xlu0 %v576, 16
      %v670 = vpop.permute.xlu0 %669
      %671 = vrot.lane.b32.xlu0 %v579, 16
      %v672 = vpop.permute.xlu0 %671
      %673 = vrot.lane.b32.xlu0 %v582, 16
      %v674 = vpop.permute.xlu0 %673
      %675 = vrot.lane.b32.xlu0 %v585, 16
      %v676 = vpop.permute.xlu0 %675
      %677 = vrot.lane.b32.xlu0 %v588, 16
      %v678 = vpop.permute.xlu0 %677
      %679 = vrot.lane.b32.xlu0 %v591, 16
      %v680 = vpop.permute.xlu0 %679
      %681 = vrot.lane.b32.xlu0 %v594, 16
      %v682 = vpop.permute.xlu0 %681
      %683 = vrot.lane.b32.xlu0 %v597, 16
      %v684 = vpop.permute.xlu0 %683
      %685 = vrot.lane.b32.xlu0 %v600, 16
      %v686 = vpop.permute.xlu0 %685
      %687 = vrot.lane.b32.xlu0 %v603, 16
      %v688 = vpop.permute.xlu0 %687
      %689 = vrot.lane.b32.xlu0 %v606, 16
      %v690 = vpop.permute.xlu0 %689
      %691 = vrot.lane.b32.xlu0 %v609, 16
      %v692 = vpop.permute.xlu0 %691
      %693 = vrot.lane.b32.xlu0 %v612, 16
      %v694 = vpop.permute.xlu0 %693
      %695 = vrot.lane.b32.xlu0 %v615, 16
      %v696 = vpop.permute.xlu0 %695
      %697 = vrot.lane.b32.xlu0 %v618, 16
      %v698 = vpop.permute.xlu0 %697
      %699 = vrot.lane.b32.xlu0 %v621, 16
      %v700 = vpop.permute.xlu0 %699
      %701 = vrot.lane.b32.xlu0 %v624, 16
      %v702 = vpop.permute.xlu0 %701
      %703 = vrot.lane.b32.xlu0 %v627, 16
      %v704 = vpop.permute.xlu0 %703
      %705 = vrot.lane.b32.xlu0 %v630, 16
      %v706 = vpop.permute.xlu0 %705
      %707 = vrot.lane.b32.xlu0 %v633, 16
      %v708 = vpop.permute.xlu0 %707
      %709 = vrot.lane.b32.xlu0 %v636, 16
      %v710 = vpop.permute.xlu0 %709
      %711 = vrot.lane.b32.xlu0 %v639, 16
      %v712 = vpop.permute.xlu0 %711
      %713 = vrot.lane.b32.xlu0 %v642, 16
      %v714 = vpop.permute.xlu0 %713
      %715 = vrot.lane.b32.xlu0 %v645, 16
      %v716 = vpop.permute.xlu0 %715
      %717 = vrot.lane.b32.xlu0 %v648, 16
      %v718 = vpop.permute.xlu0 %717
      %719 = vrot.lane.b32.xlu0 %v651, 16
      %v720 = vpop.permute.xlu0 %719
      %721 = vrot.lane.b32.xlu0 %v654, 16
      %v722 = vpop.permute.xlu0 %721
      %723 = vrot.lane.b32.xlu0 %v657, 16
      %v724 = vpop.permute.xlu0 %723
      %725 = vrot.lane.b32.xlu0 %v660, 16
      %v726 = vpop.permute.xlu0 %725
      %727 = vrot.lane.b32.xlu0 %v663, 16
      %v728 = vpop.permute.xlu0 %727
      %729 = vrot.lane.b32.xlu0 %v666, 16
      %v730 = vpop.permute.xlu0 %729
      %767 = vrot.lane.b32.xlu0 %v235, 24
      %v768 = vpop.permute.xlu0 %767
      %769 = vrot.lane.b32.xlu0 %v237, 24
      %v770 = vpop.permute.xlu0 %769
      %771 = vrot.lane.b32.xlu0 %v239, 24
      %v772 = vpop.permute.xlu0 %771
      %773 = vrot.lane.b32.xlu0 %v241, 24
      %v774 = vpop.permute.xlu0 %773
      %775 = vrot.lane.b32.xlu0 %v243, 24
      %v776 = vpop.permute.xlu0 %775
      %777 = vrot.lane.b32.xlu0 %v245, 24
      %v778 = vpop.permute.xlu0 %777
      %779 = vrot.lane.b32.xlu0 %v247, 24
      %v780 = vpop.permute.xlu0 %779
      %781 = vrot.lane.b32.xlu0 %v249, 24
      %v782 = vpop.permute.xlu0 %781
      %783 = vrot.lane.b32.xlu0 %v255, 24
      %v784 = vpop.permute.xlu0 %783
      %785 = vrot.lane.b32.xlu0 %v257, 24
      %v786 = vpop.permute.xlu0 %785
      %787 = vrot.lane.b32.xlu0 %v259, 24
      %v788 = vpop.permute.xlu0 %787
      %789 = vrot.lane.b32.xlu0 %v261, 24
      %v790 = vpop.permute.xlu0 %789
      %791 = vrot.lane.b32.xlu0 %v263, 24
      %v792 = vpop.permute.xlu0 %791
      %793 = vrot.lane.b32.xlu0 %v265, 24
      %v794 = vpop.permute.xlu0 %793
      %795 = vrot.lane.b32.xlu0 %v267, 24
      %v796 = vpop.permute.xlu0 %795
      %797 = vrot.lane.b32.xlu0 %v269, 24
      %v798 = vpop.permute.xlu0 %797
      %799 = vrot.lane.b32.xlu0 %v275, 24
      %v800 = vpop.permute.xlu0 %799
      %801 = vrot.lane.b32.xlu0 %v277, 24
      %v802 = vpop.permute.xlu0 %801
      %803 = vrot.lane.b32.xlu0 %v279, 24
      %v804 = vpop.permute.xlu0 %803
      %805 = vrot.lane.b32.xlu0 %v281, 24
      %v806 = vpop.permute.xlu0 %805
      %807 = vrot.lane.b32.xlu0 %v283, 24
      %v808 = vpop.permute.xlu0 %807
      %809 = vrot.lane.b32.xlu0 %v285, 24
      %v810 = vpop.permute.xlu0 %809
      %811 = vrot.lane.b32.xlu0 %v287, 24
      %v812 = vpop.permute.xlu0 %811
      %813 = vrot.lane.b32.xlu0 %v289, 24
      %v814 = vpop.permute.xlu0 %813
      %815 = vrot.lane.b32.xlu0 %v295, 24
      %v816 = vpop.permute.xlu0 %815
      %817 = vrot.lane.b32.xlu0 %v297, 24
      %v818 = vpop.permute.xlu0 %817
      %819 = vrot.lane.b32.xlu0 %v299, 24
      %v820 = vpop.permute.xlu0 %819
      %821 = vrot.lane.b32.xlu0 %v301, 24
      %v822 = vpop.permute.xlu0 %821
      %823 = vrot.lane.b32.xlu0 %v303, 24
      %v824 = vpop.permute.xlu0 %823
      %825 = vrot.lane.b32.xlu0 %v305, 24
      %v826 = vpop.permute.xlu0 %825
      %827 = vrot.lane.b32.xlu0 %v307, 24
      %v828 = vpop.permute.xlu0 %827
      %829 = vrot.lane.b32.xlu0 %v309, 24
      %v830 = vpop.permute.xlu0 %829
      %v867 = vrot.slane %v249, 1
      %v868 = vrot.slane %v250, 1
      %v869 = vsel %vm377, %v867, %v868
      %v870 = vrot.slane %v269, 1
      %v871 = vrot.slane %v270, 1
      %v872 = vsel %vm377, %v870, %v871
      %v873 = vrot.slane %v289, 1
      %v874 = vrot.slane %v290, 1
      %v875 = vsel %vm377, %v873, %v874
      %v876 = vrot.slane %v309, 1
      %v877 = vrot.slane %v310, 1
      %v878 = vsel %vm377, %v876, %v877
      %879 = vrot.lane.b32.xlu0 %v383, 32
      %v880 = vpop.permute.xlu0 %879
      %881 = vrot.lane.b32.xlu0 %v386, 32
      %v882 = vpop.permute.xlu0 %881
      %883 = vrot.lane.b32.xlu0 %v389, 32
      %v884 = vpop.permute.xlu0 %883
      %885 = vrot.lane.b32.xlu0 %v392, 32
      %v886 = vpop.permute.xlu0 %885
      %887 = vrot.lane.b32.xlu0 %v395, 32
      %v888 = vpop.permute.xlu0 %887
      %889 = vrot.lane.b32.xlu0 %v398, 32
      %v890 = vpop.permute.xlu0 %889
      %891 = vrot.lane.b32.xlu0 %v401, 32
      %v892 = vpop.permute.xlu0 %891
      %893 = vrot.lane.b32.xlu0 %v869, 32
      %v894 = vpop.permute.xlu0 %893
      %895 = vrot.lane.b32.xlu0 %v407, 32
      %v896 = vpop.permute.xlu0 %895
      %897 = vrot.lane.b32.xlu0 %v410, 32
      %v898 = vpop.permute.xlu0 %897
      %899 = vrot.lane.b32.xlu0 %v413, 32
      %v900 = vpop.permute.xlu0 %899
      %901 = vrot.lane.b32.xlu0 %v416, 32
      %v902 = vpop.permute.xlu0 %901
      %903 = vrot.lane.b32.xlu0 %v419, 32
      %v904 = vpop.permute.xlu0 %903
      %905 = vrot.lane.b32.xlu0 %v422, 32
      %v906 = vpop.permute.xlu0 %905
      %907 = vrot.lane.b32.xlu0 %v425, 32
      %v908 = vpop.permute.xlu0 %907
      %909 = vrot.lane.b32.xlu0 %v872, 32
      %v910 = vpop.permute.xlu0 %909
      %911 = vrot.lane.b32.xlu0 %v431, 32
      %v912 = vpop.permute.xlu0 %911
      %913 = vrot.lane.b32.xlu0 %v434, 32
      %v914 = vpop.permute.xlu0 %913
      %915 = vrot.lane.b32.xlu0 %v437, 32
      %v916 = vpop.permute.xlu0 %915
      %917 = vrot.lane.b32.xlu0 %v440, 32
      %v918 = vpop.permute.xlu0 %917
      %919 = vrot.lane.b32.xlu0 %v443, 32
      %v920 = vpop.permute.xlu0 %919
      %921 = vrot.lane.b32.xlu0 %v446, 32
      %v922 = vpop.permute.xlu0 %921
      %923 = vrot.lane.b32.xlu0 %v449, 32
      %v924 = vpop.permute.xlu0 %923
      %925 = vrot.lane.b32.xlu0 %v875, 32
      %v926 = vpop.permute.xlu0 %925
      %927 = vrot.lane.b32.xlu0 %v455, 32
      %v928 = vpop.permute.xlu0 %927
      %929 = vrot.lane.b32.xlu0 %v458, 32
      %v930 = vpop.permute.xlu0 %929
      %931 = vrot.lane.b32.xlu0 %v461, 32
      %v932 = vpop.permute.xlu0 %931
      %933 = vrot.lane.b32.xlu0 %v464, 32
      %v934 = vpop.permute.xlu0 %933
      %935 = vrot.lane.b32.xlu0 %v467, 32
      %v936 = vpop.permute.xlu0 %935
      %937 = vrot.lane.b32.xlu0 %v470, 32
      %v938 = vpop.permute.xlu0 %937
      %939 = vrot.lane.b32.xlu0 %v473, 32
      %v940 = vpop.permute.xlu0 %939
      %941 = vrot.lane.b32.xlu0 %v878, 32
      %v942 = vpop.permute.xlu0 %941
      %v975 = vrot.slane %v249, 2
      %v976 = vrot.slane %v250, 2
      %v977 = vsel %vm570, %v975, %v976
      %v978 = vrot.slane %v269, 2
      %v979 = vrot.slane %v270, 2
      %v980 = vsel %vm570, %v978, %v979
      %v981 = vrot.slane %v289, 2
      %v982 = vrot.slane %v290, 2
      %v983 = vsel %vm570, %v981, %v982
      %v984 = vrot.slane %v309, 2
      %v985 = vrot.slane %v310, 2
      %v986 = vsel %vm570, %v984, %v985
      %987 = vrot.lane.b32.xlu0 %v576, 40
      %v988 = vpop.permute.xlu0 %987
      %989 = vrot.lane.b32.xlu0 %v579, 40
      %v990 = vpop.permute.xlu0 %989
      %991 = vrot.lane.b32.xlu0 %v582, 40
      %v992 = vpop.permute.xlu0 %991
      %993 = vrot.lane.b32.xlu0 %v585, 40
      %v994 = vpop.permute.xlu0 %993
      %995 = vrot.lane.b32.xlu0 %v588, 40
      %v996 = vpop.permute.xlu0 %995
      %997 = vrot.lane.b32.xlu0 %v591, 40
      %v998 = vpop.permute.xlu0 %997
      %999 = vrot.lane.b32.xlu0 %v594, 40
      %v1000 = vpop.permute.xlu0 %999
      %1001 = vrot.lane.b32.xlu0 %v977, 40
      %v1002 = vpop.permute.xlu0 %1001
      %1003 = vrot.lane.b32.xlu0 %v600, 40
      %v1004 = vpop.permute.xlu0 %1003
      %1005 = vrot.lane.b32.xlu0 %v603, 40
      %v1006 = vpop.permute.xlu0 %1005
      %1007 = vrot.lane.b32.xlu0 %v606, 40
      %v1008 = vpop.permute.xlu0 %1007
      %1009 = vrot.lane.b32.xlu0 %v609, 40
      %v1010 = vpop.permute.xlu0 %1009
      %1011 = vrot.lane.b32.xlu0 %v612, 40
      %v1012 = vpop.permute.xlu0 %1011
      %1013 = vrot.lane.b32.xlu0 %v615, 40
      %v1014 = vpop.permute.xlu0 %1013
      %1015 = vrot.lane.b32.xlu0 %v618, 40
      %v1016 = vpop.permute.xlu0 %1015
      %1017 = vrot.lane.b32.xlu0 %v980, 40
      %v1018 = vpop.permute.xlu0 %1017
      %1019 = vrot.lane.b32.xlu0 %v624, 40
      %v1020 = vpop.permute.xlu0 %1019
      %1021 = vrot.lane.b32.xlu0 %v627, 40
      %v1022 = vpop.permute.xlu0 %1021
      %1023 = vrot.lane.b32.xlu0 %v630, 40
      %v1024 = vpop.permute.xlu0 %1023
      %1025 = vrot.lane.b32.xlu0 %v633, 40
      %v1026 = vpop.permute.xlu0 %1025
      %1027 = vrot.lane.b32.xlu0 %v636, 40
      %v1028 = vpop.permute.xlu0 %1027
      %1029 = vrot.lane.b32.xlu0 %v639, 40
      %v1030 = vpop.permute.xlu0 %1029
      %1031 = vrot.lane.b32.xlu0 %v642, 40
      %v1032 = vpop.permute.xlu0 %1031
      %1033 = vrot.lane.b32.xlu0 %v983, 40
      %v1034 = vpop.permute.xlu0 %1033
      %1035 = vrot.lane.b32.xlu0 %v648, 40
      %v1036 = vpop.permute.xlu0 %1035
      %1037 = vrot.lane.b32.xlu0 %v651, 40
      %v1038 = vpop.permute.xlu0 %1037
      %1039 = vrot.lane.b32.xlu0 %v654, 40
      %v1040 = vpop.permute.xlu0 %1039
      %1041 = vrot.lane.b32.xlu0 %v657, 40
      %v1042 = vpop.permute.xlu0 %1041
      %1043 = vrot.lane.b32.xlu0 %v660, 40
      %v1044 = vpop.permute.xlu0 %1043
      %1045 = vrot.lane.b32.xlu0 %v663, 40
      %v1046 = vpop.permute.xlu0 %1045
      %1047 = vrot.lane.b32.xlu0 %v666, 40
      %v1048 = vpop.permute.xlu0 %1047
      %1049 = vrot.lane.b32.xlu0 %v986, 40
      %v1050 = vpop.permute.xlu0 %1049
      %1087 = vrot.lane.b32.xlu0 %v237, 48
      %v1088 = vpop.permute.xlu0 %1087
      %1089 = vrot.lane.b32.xlu0 %v239, 48
      %v1090 = vpop.permute.xlu0 %1089
      %1091 = vrot.lane.b32.xlu0 %v241, 48
      %v1092 = vpop.permute.xlu0 %1091
      %1093 = vrot.lane.b32.xlu0 %v243, 48
      %v1094 = vpop.permute.xlu0 %1093
      %1095 = vrot.lane.b32.xlu0 %v245, 48
      %v1096 = vpop.permute.xlu0 %1095
      %1097 = vrot.lane.b32.xlu0 %v247, 48
      %v1098 = vpop.permute.xlu0 %1097
      %1099 = vrot.lane.b32.xlu0 %v249, 48
      %v1100 = vpop.permute.xlu0 %1099
      %1101 = vrot.lane.b32.xlu0 %v251, 48
      %v1102 = vpop.permute.xlu0 %1101
      %1103 = vrot.lane.b32.xlu0 %v257, 48
      %v1104 = vpop.permute.xlu0 %1103
      %1105 = vrot.lane.b32.xlu0 %v259, 48
      %v1106 = vpop.permute.xlu0 %1105
      %1107 = vrot.lane.b32.xlu0 %v261, 48
      %v1108 = vpop.permute.xlu0 %1107
      %1109 = vrot.lane.b32.xlu0 %v263, 48
      %v1110 = vpop.permute.xlu0 %1109
      %1111 = vrot.lane.b32.xlu0 %v265, 48
      %v1112 = vpop.permute.xlu0 %1111
      %1113 = vrot.lane.b32.xlu0 %v267, 48
      %v1114 = vpop.permute.xlu0 %1113
      %1115 = vrot.lane.b32.xlu0 %v269, 48
      %v1116 = vpop.permute.xlu0 %1115
      %1117 = vrot.lane.b32.xlu0 %v271, 48
      %v1118 = vpop.permute.xlu0 %1117
      %1119 = vrot.lane.b32.xlu0 %v277, 48
      %v1120 = vpop.permute.xlu0 %1119
      %1121 = vrot.lane.b32.xlu0 %v279, 48
      %v1122 = vpop.permute.xlu0 %1121
      %1123 = vrot.lane.b32.xlu0 %v281, 48
      %v1124 = vpop.permute.xlu0 %1123
      %1125 = vrot.lane.b32.xlu0 %v283, 48
      %v1126 = vpop.permute.xlu0 %1125
      %1127 = vrot.lane.b32.xlu0 %v285, 48
      %v1128 = vpop.permute.xlu0 %1127
      %1129 = vrot.lane.b32.xlu0 %v287, 48
      %v1130 = vpop.permute.xlu0 %1129
      %1131 = vrot.lane.b32.xlu0 %v289, 48
      %v1132 = vpop.permute.xlu0 %1131
      %1133 = vrot.lane.b32.xlu0 %v291, 48
      %v1134 = vpop.permute.xlu0 %1133
      %1135 = vrot.lane.b32.xlu0 %v297, 48
      %v1136 = vpop.permute.xlu0 %1135
      %1137 = vrot.lane.b32.xlu0 %v299, 48
      %v1138 = vpop.permute.xlu0 %1137
      %1139 = vrot.lane.b32.xlu0 %v301, 48
      %v1140 = vpop.permute.xlu0 %1139
      %1141 = vrot.lane.b32.xlu0 %v303, 48
      %v1142 = vpop.permute.xlu0 %1141
      %1143 = vrot.lane.b32.xlu0 %v305, 48
      %v1144 = vpop.permute.xlu0 %1143
      %1145 = vrot.lane.b32.xlu0 %v307, 48
      %v1146 = vpop.permute.xlu0 %1145
      %1147 = vrot.lane.b32.xlu0 %v309, 48
      %v1148 = vpop.permute.xlu0 %1147
      %1149 = vrot.lane.b32.xlu0 %v311, 48
      %v1150 = vpop.permute.xlu0 %1149
      %v1187 = vrot.slane %v251, 1
      %v1188 = vrot.slane %v252, 1
      %v1189 = vsel %vm377, %v1187, %v1188
      %v1190 = vrot.slane %v271, 1
      %v1191 = vrot.slane %v272, 1
      %v1192 = vsel %vm377, %v1190, %v1191
      %v1193 = vrot.slane %v291, 1
      %v1194 = vrot.slane %v292, 1
      %v1195 = vsel %vm377, %v1193, %v1194
      %v1196 = vrot.slane %v311, 1
      %v1197 = vrot.slane %v312, 1
      %v1198 = vsel %vm377, %v1196, %v1197
      %1199 = vrot.lane.b32.xlu0 %v386, 56
      %v1200 = vpop.permute.xlu0 %1199
      %1201 = vrot.lane.b32.xlu0 %v389, 56
      %v1202 = vpop.permute.xlu0 %1201
      %1203 = vrot.lane.b32.xlu0 %v392, 56
      %v1204 = vpop.permute.xlu0 %1203
      %1205 = vrot.lane.b32.xlu0 %v395, 56
      %v1206 = vpop.permute.xlu0 %1205
      %1207 = vrot.lane.b32.xlu0 %v398, 56
      %v1208 = vpop.permute.xlu0 %1207
      %1209 = vrot.lane.b32.xlu0 %v401, 56
      %v1210 = vpop.permute.xlu0 %1209
      %1211 = vrot.lane.b32.xlu0 %v869, 56
      %v1212 = vpop.permute.xlu0 %1211
      %1213 = vrot.lane.b32.xlu0 %v1189, 56
      %v1214 = vpop.permute.xlu0 %1213
      %1215 = vrot.lane.b32.xlu0 %v410, 56
      %v1216 = vpop.permute.xlu0 %1215
      %1217 = vrot.lane.b32.xlu0 %v413, 56
      %v1218 = vpop.permute.xlu0 %1217
      %1219 = vrot.lane.b32.xlu0 %v416, 56
      %v1220 = vpop.permute.xlu0 %1219
      %1221 = vrot.lane.b32.xlu0 %v419, 56
      %v1222 = vpop.permute.xlu0 %1221
      %1223 = vrot.lane.b32.xlu0 %v422, 56
      %v1224 = vpop.permute.xlu0 %1223
      %1225 = vrot.lane.b32.xlu0 %v425, 56
      %v1226 = vpop.permute.xlu0 %1225
      %1227 = vrot.lane.b32.xlu0 %v872, 56
      %v1228 = vpop.permute.xlu0 %1227
      %1229 = vrot.lane.b32.xlu0 %v1192, 56
      %v1230 = vpop.permute.xlu0 %1229
      %1231 = vrot.lane.b32.xlu0 %v434, 56
      %v1232 = vpop.permute.xlu0 %1231
      %1233 = vrot.lane.b32.xlu0 %v437, 56
      %v1234 = vpop.permute.xlu0 %1233
      %1235 = vrot.lane.b32.xlu0 %v440, 56
      %v1236 = vpop.permute.xlu0 %1235
      %1237 = vrot.lane.b32.xlu0 %v443, 56
      %v1238 = vpop.permute.xlu0 %1237
      %1239 = vrot.lane.b32.xlu0 %v446, 56
      %v1240 = vpop.permute.xlu0 %1239
      %1241 = vrot.lane.b32.xlu0 %v449, 56
      %v1242 = vpop.permute.xlu0 %1241
      %1243 = vrot.lane.b32.xlu0 %v875, 56
      %v1244 = vpop.permute.xlu0 %1243
      %1245 = vrot.lane.b32.xlu0 %v1195, 56
      %v1246 = vpop.permute.xlu0 %1245
      %1247 = vrot.lane.b32.xlu0 %v458, 56
      %v1248 = vpop.permute.xlu0 %1247
      %1249 = vrot.lane.b32.xlu0 %v461, 56
      %v1250 = vpop.permute.xlu0 %1249
      %1251 = vrot.lane.b32.xlu0 %v464, 56
      %v1252 = vpop.permute.xlu0 %1251
      %1253 = vrot.lane.b32.xlu0 %v467, 56
      %v1254 = vpop.permute.xlu0 %1253
      %1255 = vrot.lane.b32.xlu0 %v470, 56
      %v1256 = vpop.permute.xlu0 %1255
      %1257 = vrot.lane.b32.xlu0 %v473, 56
      %v1258 = vpop.permute.xlu0 %1257
      %1259 = vrot.lane.b32.xlu0 %v878, 56
      %v1260 = vpop.permute.xlu0 %1259
      %1261 = vrot.lane.b32.xlu0 %v1198, 56
      %v1262 = vpop.permute.xlu0 %1261
      %v1295 = vrot.slane %v251, 2
      %v1296 = vrot.slane %v252, 2
      %v1297 = vsel %vm570, %v1295, %v1296
      %v1298 = vrot.slane %v271, 2
      %v1299 = vrot.slane %v272, 2
      %v1300 = vsel %vm570, %v1298, %v1299
      %v1301 = vrot.slane %v291, 2
      %v1302 = vrot.slane %v292, 2
      %v1303 = vsel %vm570, %v1301, %v1302
      %v1304 = vrot.slane %v311, 2
      %v1305 = vrot.slane %v312, 2
      %v1306 = vsel %vm570, %v1304, %v1305
      %1307 = vrot.lane.b32.xlu0 %v579, 64
      %v1308 = vpop.permute.xlu0 %1307
      %1309 = vrot.lane.b32.xlu0 %v582, 64
      %v1310 = vpop.permute.xlu0 %1309
      %1311 = vrot.lane.b32.xlu0 %v585, 64
      %v1312 = vpop.permute.xlu0 %1311
      %1313 = vrot.lane.b32.xlu0 %v588, 64
      %v1314 = vpop.permute.xlu0 %1313
      %1315 = vrot.lane.b32.xlu0 %v591, 64
      %v1316 = vpop.permute.xlu0 %1315
      %1317 = vrot.lane.b32.xlu0 %v594, 64
      %v1318 = vpop.permute.xlu0 %1317
      %1319 = vrot.lane.b32.xlu0 %v977, 64
      %v1320 = vpop.permute.xlu0 %1319
      %1321 = vrot.lane.b32.xlu0 %v1297, 64
      %v1322 = vpop.permute.xlu0 %1321
      %1323 = vrot.lane.b32.xlu0 %v603, 64
      %v1324 = vpop.permute.xlu0 %1323
      %1325 = vrot.lane.b32.xlu0 %v606, 64
      %v1326 = vpop.permute.xlu0 %1325
      %1327 = vrot.lane.b32.xlu0 %v609, 64
      %v1328 = vpop.permute.xlu0 %1327
      %1329 = vrot.lane.b32.xlu0 %v612, 64
      %v1330 = vpop.permute.xlu0 %1329
      %1331 = vrot.lane.b32.xlu0 %v615, 64
      %v1332 = vpop.permute.xlu0 %1331
      %1333 = vrot.lane.b32.xlu0 %v618, 64
      %v1334 = vpop.permute.xlu0 %1333
      %1335 = vrot.lane.b32.xlu0 %v980, 64
      %v1336 = vpop.permute.xlu0 %1335
      %1337 = vrot.lane.b32.xlu0 %v1300, 64
      %v1338 = vpop.permute.xlu0 %1337
      %1339 = vrot.lane.b32.xlu0 %v627, 64
      %v1340 = vpop.permute.xlu0 %1339
      %1341 = vrot.lane.b32.xlu0 %v630, 64
      %v1342 = vpop.permute.xlu0 %1341
      %1343 = vrot.lane.b32.xlu0 %v633, 64
      %v1344 = vpop.permute.xlu0 %1343
      %1345 = vrot.lane.b32.xlu0 %v636, 64
      %v1346 = vpop.permute.xlu0 %1345
      %1347 = vrot.lane.b32.xlu0 %v639, 64
      %v1348 = vpop.permute.xlu0 %1347
      %1349 = vrot.lane.b32.xlu0 %v642, 64
      %v1350 = vpop.permute.xlu0 %1349
      %1351 = vrot.lane.b32.xlu0 %v983, 64
      %v1352 = vpop.permute.xlu0 %1351
      %1353 = vrot.lane.b32.xlu0 %v1303, 64
      %v1354 = vpop.permute.xlu0 %1353
      %1355 = vrot.lane.b32.xlu0 %v651, 64
      %v1356 = vpop.permute.xlu0 %1355
      %1357 = vrot.lane.b32.xlu0 %v654, 64
      %v1358 = vpop.permute.xlu0 %1357
      %1359 = vrot.lane.b32.xlu0 %v657, 64
      %v1360 = vpop.permute.xlu0 %1359
      %1361 = vrot.lane.b32.xlu0 %v660, 64
      %v1362 = vpop.permute.xlu0 %1361
      %1363 = vrot.lane.b32.xlu0 %v663, 64
      %v1364 = vpop.permute.xlu0 %1363
      %1365 = vrot.lane.b32.xlu0 %v666, 64
      %v1366 = vpop.permute.xlu0 %1365
      %1367 = vrot.lane.b32.xlu0 %v986, 64
      %v1368 = vpop.permute.xlu0 %1367
      %1369 = vrot.lane.b32.xlu0 %v1306, 64
      %v1370 = vpop.permute.xlu0 %1369
      %vm1403 = vcmask 64512
      %v1404 = vsel %vm1403, %v233, %v475
      %v1405 = vsel %vm1403, %v235, %v477
      %v1406 = vsel %vm1403, %v237, %v479
      %v1407 = vsel %vm1403, %v239, %v481
      %v1408 = vsel %vm1403, %v241, %v483
      %v1409 = vsel %vm1403, %v243, %v485
      %v1410 = vsel %vm1403, %v245, %v487
      %v1411 = vsel %vm1403, %v247, %v489
      %v1412 = vsel %vm1403, %v253, %v491
      %v1413 = vsel %vm1403, %v255, %v493
      %v1414 = vsel %vm1403, %v257, %v495
      %v1415 = vsel %vm1403, %v259, %v497
      %v1416 = vsel %vm1403, %v261, %v499
      %v1417 = vsel %vm1403, %v263, %v501
      %v1418 = vsel %vm1403, %v265, %v503
      %v1419 = vsel %vm1403, %v267, %v505
      %v1420 = vsel %vm1403, %v273, %v507
      %v1421 = vsel %vm1403, %v275, %v509
      %v1422 = vsel %vm1403, %v277, %v511
      %v1423 = vsel %vm1403, %v279, %v513
      %v1424 = vsel %vm1403, %v281, %v515
      %v1425 = vsel %vm1403, %v283, %v517
      %v1426 = vsel %vm1403, %v285, %v519
      %v1427 = vsel %vm1403, %v287, %v521
      %v1428 = vsel %vm1403, %v293, %v523
      %v1429 = vsel %vm1403, %v295, %v525
      %v1430 = vsel %vm1403, %v297, %v527
      %v1431 = vsel %vm1403, %v299, %v529
      %v1432 = vsel %vm1403, %v301, %v531
      %v1433 = vsel %vm1403, %v303, %v533
      %v1434 = vsel %vm1403, %v305, %v535
      %v1435 = vsel %vm1403, %v307, %v537
      %vm1436 = vcmask 130048
      %v1437 = vsel %vm1436, %v1404, %v668
      %v1438 = vsel %vm1436, %v1405, %v670
      %v1439 = vsel %vm1436, %v1406, %v672
      %v1440 = vsel %vm1436, %v1407, %v674
      %v1441 = vsel %vm1436, %v1408, %v676
      %v1442 = vsel %vm1436, %v1409, %v678
      %v1443 = vsel %vm1436, %v1410, %v680
      %v1444 = vsel %vm1436, %v1411, %v682
      %v1445 = vsel %vm1436, %v1412, %v684
      %v1446 = vsel %vm1436, %v1413, %v686
      %v1447 = vsel %vm1436, %v1414, %v688
      %v1448 = vsel %vm1436, %v1415, %v690
      %v1449 = vsel %vm1436, %v1416, %v692
      %v1450 = vsel %vm1436, %v1417, %v694
      %v1451 = vsel %vm1436, %v1418, %v696
      %v1452 = vsel %vm1436, %v1419, %v698
      %v1453 = vsel %vm1436, %v1420, %v700
      %v1454 = vsel %vm1436, %v1421, %v702
      %v1455 = vsel %vm1436, %v1422, %v704
      %v1456 = vsel %vm1436, %v1423, %v706
      %v1457 = vsel %vm1436, %v1424, %v708
      %v1458 = vsel %vm1436, %v1425, %v710
      %v1459 = vsel %vm1436, %v1426, %v712
      %v1460 = vsel %vm1436, %v1427, %v714
      %v1461 = vsel %vm1436, %v1428, %v716
      %v1462 = vsel %vm1436, %v1429, %v718
      %v1463 = vsel %vm1436, %v1430, %v720
      %v1464 = vsel %vm1436, %v1431, %v722
      %v1465 = vsel %vm1436, %v1432, %v724
      %v1466 = vsel %vm1436, %v1433, %v726
      %v1467 = vsel %vm1436, %v1434, %v728
      %v1468 = vsel %vm1436, %v1435, %v730
      %vm1469 = vcmask 195584
      %v1470 = vsel %vm1469, %v1437, %v768
      %v1471 = vsel %vm1469, %v1438, %v770
      %v1472 = vsel %vm1469, %v1439, %v772
      %v1473 = vsel %vm1469, %v1440, %v774
      %v1474 = vsel %vm1469, %v1441, %v776
      %v1475 = vsel %vm1469, %v1442, %v778
      %v1476 = vsel %vm1469, %v1443, %v780
      %v1477 = vsel %vm1469, %v1444, %v782
      %v1478 = vsel %vm1469, %v1445, %v784
      %v1479 = vsel %vm1469, %v1446, %v786
      %v1480 = vsel %vm1469, %v1447, %v788
      %v1481 = vsel %vm1469, %v1448, %v790
      %v1482 = vsel %vm1469, %v1449, %v792
      %v1483 = vsel %vm1469, %v1450, %v794
      %v1484 = vsel %vm1469, %v1451, %v796
      %v1485 = vsel %vm1469, %v1452, %v798
      %v1486 = vsel %vm1469, %v1453, %v800
      %v1487 = vsel %vm1469, %v1454, %v802
      %v1488 = vsel %vm1469, %v1455, %v804
      %v1489 = vsel %vm1469, %v1456, %v806
      %v1490 = vsel %vm1469, %v1457, %v808
      %v1491 = vsel %vm1469, %v1458, %v810
      %v1492 = vsel %vm1469, %v1459, %v812
      %v1493 = vsel %vm1469, %v1460, %v814
      %v1494 = vsel %vm1469, %v1461, %v816
      %v1495 = vsel %vm1469, %v1462, %v818
      %v1496 = vsel %vm1469, %v1463, %v820
      %v1497 = vsel %vm1469, %v1464, %v822
      %v1498 = vsel %vm1469, %v1465, %v824
      %v1499 = vsel %vm1469, %v1466, %v826
      %v1500 = vsel %vm1469, %v1467, %v828
      %v1501 = vsel %vm1469, %v1468, %v830
      %vm1502 = vcmask 261120
      %v1503 = vsel %vm1502, %v1470, %v880
      %v1504 = vsel %vm1502, %v1471, %v882
      %v1505 = vsel %vm1502, %v1472, %v884
      %v1506 = vsel %vm1502, %v1473, %v886
      %v1507 = vsel %vm1502, %v1474, %v888
      %v1508 = vsel %vm1502, %v1475, %v890
      %v1509 = vsel %vm1502, %v1476, %v892
      %v1510 = vsel %vm1502, %v1477, %v894
      %v1511 = vsel %vm1502, %v1478, %v896
      %v1512 = vsel %vm1502, %v1479, %v898
      %v1513 = vsel %vm1502, %v1480, %v900
      %v1514 = vsel %vm1502, %v1481, %v902
      %v1515 = vsel %vm1502, %v1482, %v904
      %v1516 = vsel %vm1502, %v1483, %v906
      %v1517 = vsel %vm1502, %v1484, %v908
      %v1518 = vsel %vm1502, %v1485, %v910
      %v1519 = vsel %vm1502, %v1486, %v912
      %v1520 = vsel %vm1502, %v1487, %v914
      %v1521 = vsel %vm1502, %v1488, %v916
      %v1522 = vsel %vm1502, %v1489, %v918
      %v1523 = vsel %vm1502, %v1490, %v920
      %v1524 = vsel %vm1502, %v1491, %v922
      %v1525 = vsel %vm1502, %v1492, %v924
      %v1526 = vsel %vm1502, %v1493, %v926
      %v1527 = vsel %vm1502, %v1494, %v928
      %v1528 = vsel %vm1502, %v1495, %v930
      %v1529 = vsel %vm1502, %v1496, %v932
      %v1530 = vsel %vm1502, %v1497, %v934
      %v1531 = vsel %vm1502, %v1498, %v936
      %v1532 = vsel %vm1502, %v1499, %v938
      %v1533 = vsel %vm1502, %v1500, %v940
      %v1534 = vsel %vm1502, %v1501, %v942
      %vm1535 = vcmask 326656
      %v1536 = vsel %vm1535, %v1503, %v988
      %v1537 = vsel %vm1535, %v1504, %v990
      %v1538 = vsel %vm1535, %v1505, %v992
      %v1539 = vsel %vm1535, %v1506, %v994
      %v1540 = vsel %vm1535, %v1507, %v996
      %v1541 = vsel %vm1535, %v1508, %v998
      %v1542 = vsel %vm1535, %v1509, %v1000
      %v1543 = vsel %vm1535, %v1510, %v1002
      %v1544 = vsel %vm1535, %v1511, %v1004
      %v1545 = vsel %vm1535, %v1512, %v1006
      %v1546 = vsel %vm1535, %v1513, %v1008
      %v1547 = vsel %vm1535, %v1514, %v1010
      %v1548 = vsel %vm1535, %v1515, %v1012
      %v1549 = vsel %vm1535, %v1516, %v1014
      %v1550 = vsel %vm1535, %v1517, %v1016
      %v1551 = vsel %vm1535, %v1518, %v1018
      %v1552 = vsel %vm1535, %v1519, %v1020
      %v1553 = vsel %vm1535, %v1520, %v1022
      %v1554 = vsel %vm1535, %v1521, %v1024
      %v1555 = vsel %vm1535, %v1522, %v1026
      %v1556 = vsel %vm1535, %v1523, %v1028
      %v1557 = vsel %vm1535, %v1524, %v1030
      %v1558 = vsel %vm1535, %v1525, %v1032
      %v1559 = vsel %vm1535, %v1526, %v1034
      %v1560 = vsel %vm1535, %v1527, %v1036
      %v1561 = vsel %vm1535, %v1528, %v1038
      %v1562 = vsel %vm1535, %v1529, %v1040
      %v1563 = vsel %vm1535, %v1530, %v1042
      %v1564 = vsel %vm1535, %v1531, %v1044
      %v1565 = vsel %vm1535, %v1532, %v1046
      %v1566 = vsel %vm1535, %v1533, %v1048
      %v1567 = vsel %vm1535, %v1534, %v1050
      %vm1568 = vcmask 392192
      %v1569 = vsel %vm1568, %v1536, %v1088
      %v1570 = vsel %vm1568, %v1537, %v1090
      %v1571 = vsel %vm1568, %v1538, %v1092
      %v1572 = vsel %vm1568, %v1539, %v1094
      %v1573 = vsel %vm1568, %v1540, %v1096
      %v1574 = vsel %vm1568, %v1541, %v1098
      %v1575 = vsel %vm1568, %v1542, %v1100
      %v1576 = vsel %vm1568, %v1543, %v1102
      %v1577 = vsel %vm1568, %v1544, %v1104
      %v1578 = vsel %vm1568, %v1545, %v1106
      %v1579 = vsel %vm1568, %v1546, %v1108
      %v1580 = vsel %vm1568, %v1547, %v1110
      %v1581 = vsel %vm1568, %v1548, %v1112
      %v1582 = vsel %vm1568, %v1549, %v1114
      %v1583 = vsel %vm1568, %v1550, %v1116
      %v1584 = vsel %vm1568, %v1551, %v1118
      %v1585 = vsel %vm1568, %v1552, %v1120
      %v1586 = vsel %vm1568, %v1553, %v1122
      %v1587 = vsel %vm1568, %v1554, %v1124
      %v1588 = vsel %vm1568, %v1555, %v1126
      %v1589 = vsel %vm1568, %v1556, %v1128
      %v1590 = vsel %vm1568, %v1557, %v1130
      %v1591 = vsel %vm1568, %v1558, %v1132
      %v1592 = vsel %vm1568, %v1559, %v1134
      %v1593 = vsel %vm1568, %v1560, %v1136
      %v1594 = vsel %vm1568, %v1561, %v1138
      %v1595 = vsel %vm1568, %v1562, %v1140
      %v1596 = vsel %vm1568, %v1563, %v1142
      %v1597 = vsel %vm1568, %v1564, %v1144
      %v1598 = vsel %vm1568, %v1565, %v1146
      %v1599 = vsel %vm1568, %v1566, %v1148
      %v1600 = vsel %vm1568, %v1567, %v1150
      %vm1601 = vcmask 457728
      %v1602 = vsel %vm1601, %v1569, %v1200
      %v1603 = vsel %vm1601, %v1570, %v1202
      %v1604 = vsel %vm1601, %v1571, %v1204
      %v1605 = vsel %vm1601, %v1572, %v1206
      %v1606 = vsel %vm1601, %v1573, %v1208
      %v1607 = vsel %vm1601, %v1574, %v1210
      %v1608 = vsel %vm1601, %v1575, %v1212
      %v1609 = vsel %vm1601, %v1576, %v1214
      %v1610 = vsel %vm1601, %v1577, %v1216
      %v1611 = vsel %vm1601, %v1578, %v1218
      %v1612 = vsel %vm1601, %v1579, %v1220
      %v1613 = vsel %vm1601, %v1580, %v1222
      %v1614 = vsel %vm1601, %v1581, %v1224
      %v1615 = vsel %vm1601, %v1582, %v1226
      %v1616 = vsel %vm1601, %v1583, %v1228
      %v1617 = vsel %vm1601, %v1584, %v1230
      %v1618 = vsel %vm1601, %v1585, %v1232
      %v1619 = vsel %vm1601, %v1586, %v1234
      %v1620 = vsel %vm1601, %v1587, %v1236
      %v1621 = vsel %vm1601, %v1588, %v1238
      %v1622 = vsel %vm1601, %v1589, %v1240
      %v1623 = vsel %vm1601, %v1590, %v1242
      %v1624 = vsel %vm1601, %v1591, %v1244
      %v1625 = vsel %vm1601, %v1592, %v1246
      %v1626 = vsel %vm1601, %v1593, %v1248
      %v1627 = vsel %vm1601, %v1594, %v1250
      %v1628 = vsel %vm1601, %v1595, %v1252
      %v1629 = vsel %vm1601, %v1596, %v1254
      %v1630 = vsel %vm1601, %v1597, %v1256
      %v1631 = vsel %vm1601, %v1598, %v1258
      %v1632 = vsel %vm1601, %v1599, %v1260
      %v1633 = vsel %vm1601, %v1600, %v1262
      %vm1634 = vcmask 523264
      %v1635 = vsel %vm1634, %v1602, %v1308
      %v1636 = vsel %vm1634, %v1603, %v1310
      %v1637 = vsel %vm1634, %v1604, %v1312
      %v1638 = vsel %vm1634, %v1605, %v1314
      %v1639 = vsel %vm1634, %v1606, %v1316
      %v1640 = vsel %vm1634, %v1607, %v1318
      %v1641 = vsel %vm1634, %v1608, %v1320
      %v1642 = vsel %vm1634, %v1609, %v1322
      %v1643 = vsel %vm1634, %v1610, %v1324
      %v1644 = vsel %vm1634, %v1611, %v1326
      %v1645 = vsel %vm1634, %v1612, %v1328
      %v1646 = vsel %vm1634, %v1613, %v1330
      %v1647 = vsel %vm1634, %v1614, %v1332
      %v1648 = vsel %vm1634, %v1615, %v1334
      %v1649 = vsel %vm1634, %v1616, %v1336
      %v1650 = vsel %vm1634, %v1617, %v1338
      %v1651 = vsel %vm1634, %v1618, %v1340
      %v1652 = vsel %vm1634, %v1619, %v1342
      %v1653 = vsel %vm1634, %v1620, %v1344
      %v1654 = vsel %vm1634, %v1621, %v1346
      %v1655 = vsel %vm1634, %v1622, %v1348
      %v1656 = vsel %vm1634, %v1623, %v1350
      %v1657 = vsel %vm1634, %v1624, %v1352
      %v1658 = vsel %vm1634, %v1625, %v1354
      %v1659 = vsel %vm1634, %v1626, %v1356
      %v1660 = vsel %vm1634, %v1627, %v1358
      %v1661 = vsel %vm1634, %v1628, %v1360
      %v1662 = vsel %vm1634, %v1629, %v1362
      %v1663 = vsel %vm1634, %v1630, %v1364
      %v1664 = vsel %vm1634, %v1631, %v1366
      %v1665 = vsel %vm1634, %v1632, %v1368
      %v1666 = vsel %vm1634, %v1633, %v1370
      %v1667 = vpack.c.bf16 %v1636, %v1635
      %v1668 = vpack.c.bf16 %v1638, %v1637
      %v1669 = vpack.c.bf16 %v1640, %v1639
      %v1670 = vpack.c.bf16 %v1642, %v1641
      %v1671 = vpack.c.bf16 %v1644, %v1643
      %v1672 = vpack.c.bf16 %v1646, %v1645
      %v1673 = vpack.c.bf16 %v1648, %v1647
      %v1674 = vpack.c.bf16 %v1650, %v1649
      %v1675 = vpack.c.bf16 %v1652, %v1651
      %v1676 = vpack.c.bf16 %v1654, %v1653
      %v1677 = vpack.c.bf16 %v1656, %v1655
      %v1678 = vpack.c.bf16 %v1658, %v1657
      %v1679 = vpack.c.bf16 %v1660, %v1659
      %v1680 = vpack.c.bf16 %v1662, %v1661
      %v1681 = vpack.c.bf16 %v1664, %v1663
      %v1682 = vpack.c.bf16 %v1666, %v1665
      %v1683 = vld [vmem:[%s1] sm:$0xf]
      %v1684 = vld [vmem:[%s1 + $0x4] sm:$0xf]
      %v1685 = vld [vmem:[%s1 + $0x8] sm:$0xf]
      %v1686 = vld [vmem:[%s1 + $0xc] sm:$0xf]
      %v1687 = vld [vmem:[%s1 + $0x10] sm:$0xf]
      %v1688 = vld [vmem:[%s1 + $0x14] sm:$0xf]
      %v1689 = vld [vmem:[%s1 + $0x18] sm:$0xf]
      %v1690 = vld [vmem:[%s1 + $0x1c] sm:$0xf]
      %v1691 = vld [vmem:[%s1 + $0x20] sm:$0xf]
      %v1701 = vunpack.c.l.b16 %v1683
      %v1702 = vunpack.c.l.b16 %v1684
      %v1703 = vunpack.c.l.b16 %v1685
      %v1704 = vunpack.c.l.b16 %v1686
      %v1705 = vunpack.c.l.b16 %v1687
      %v1706 = vunpack.c.l.b16 %v1688
      %v1707 = vunpack.c.l.b16 %v1689
      %v1708 = vunpack.c.l.b16 %v1690
      %v1709 = vunpack.c.l.b16 %v1691
      %v1710 = vpack.c.b16 %v1702, %v1701
      %v1711 = vpack.c.b16 %v1704, %v1703
      %v1712 = vpack.c.b16 %v1706, %v1705
      %v1713 = vpack.c.b16 %v1708, %v1707
      %v1714 = vpack.c.b16 %v1709, %v1709
      %vm1719 = vcmask 588800
      %v1721 = vsel %vm1719, %v1667, 0
      %v1724 = vsel %vm1719, %v1668, 0
      %v1727 = vsel %vm1719, %v1669, 0
      %v1730 = vsel %vm1719, %v1670, 0
      %v1733 = vsel %vm1719, %v1671, 0
      %v1736 = vsel %vm1719, %v1672, 0
      %v1739 = vsel %vm1719, %v1673, 0
      %v1742 = vsel %vm1719, %v1674, 0
      %v1745 = vsel %vm1719, %v1675, 0
      %v1748 = vsel %vm1719, %v1676, 0
      %v1751 = vsel %vm1719, %v1677, 0
      %v1754 = vsel %vm1719, %v1678, 0
      %v1757 = vsel %vm1719, %v1679, 0
      %v1760 = vsel %vm1719, %v1680, 0
      %v1763 = vsel %vm1719, %v1681, 0
      %v1766 = vsel %vm1719, %v1682, 0
      %vm1768 = vcmask 1043456
      %v1770 = vsel %vm1768, %v1714, 0
      %1772 = vmatprep.subr.bf16.mxu0 0
      %1773 = vmatpush1.bf16.msra.mxu0 %v1710
      %1774 = vmatprep.subr.bf16.mxu0 0
      %1775 = vmatpush1.bf16.msra.mxu0 %v1711
      %1776 = vmatprep.subr.bf16.mxu0 0
      %1777 = vmatpush1.bf16.msra.mxu0 %v1712
      %1778 = vmatprep.subr.bf16.mxu0 0
      %1779 = vmatpush1.bf16.msra.mxu0 %v1713
      %1780 = vmatprep.subr.bf16.mxu0 0
      %1781 = vmatpush1.bf16.msra.mxu0 %v1770
      %1782 = vmatprep.subr.bf16.mxu0 0
      %1783 = vmatpush1.bf16.msra.mxu0 0
      %1784 = vmatprep.subr.bf16.mxu0 0
      %1785 = vmatpush1.bf16.msra.mxu0 0
      %1786 = vmatprep.subr.bf16.mxu0 0
      %1787 = vmatpush1.bf16.msra.mxu0 0
      %1788 = vmatprep.subr.bf16.mxu0 0
      %1789 = vmatpush1.bf16.msra.mxu0 0
      %1790 = vmatprep.subr.bf16.mxu0 0
      %1791 = vmatpush1.bf16.msra.mxu0 0
      %1792 = vmatprep.subr.bf16.mxu0 0
      %1793 = vmatpush1.bf16.msra.mxu0 0
      %1794 = vmatprep.subr.bf16.mxu0 0
      %1795 = vmatpush1.bf16.msra.mxu0 0
      %1796 = vmatprep.subr.bf16.mxu0 0
      %1797 = vmatpush1.bf16.msra.mxu0 0
      %1798 = vmatprep.subr.bf16.mxu0 0
      %1799 = vmatpush1.bf16.msra.mxu0 0
      %1800 = vmatprep.subr.bf16.mxu0 0
      %1801 = vmatpush1.bf16.msra.mxu0 0
      %1802 = vmatprep.subr.bf16.mxu0 0
      %1803 = vmatpush1.bf16.msra.mxu0 0
      %1804 = vmatprep.mubr.bf16.mxu0 0
      %1805 = vmatmul.mubr.bf16.gmra.mrb[0].mxu0 %v1721
      %v1806 = vpop.f32.mrb[0].mxu0
      %v1807 = vadd.f32 0.0, %v1806
      %v1808 = vpop.f32.mrb[0].mxu0
      %v1809 = vpop.f32.mrb[0].mxu0
      %v1810 = vadd.f32 0.0, %v1809
      %v1811 = vpop.f32.mrb[0].mxu0
      %1812 = vmatprep.mubr.bf16.mxu0 0
      %1813 = vmatmul.mubr.bf16.gmra.mrb[0].mxu0 %v1724
      %v1814 = vpop.f32.mrb[0].mxu0
      %v1815 = vadd.f32 0.0, %v1814
      %v1816 = vpop.f32.mrb[0].mxu0
      %v1817 = vpop.f32.mrb[0].mxu0
      %v1818 = vadd.f32 0.0, %v1817
      %v1819 = vpop.f32.mrb[0].mxu0
      %1820 = vmatprep.mubr.bf16.mxu0 0
      %1821 = vmatmul.mubr.bf16.gmra.mrb[0].mxu0 %v1727
      %v1822 = vpop.f32.mrb[0].mxu0
      %v1823 = vadd.f32 0.0, %v1822
      %v1824 = vpop.f32.mrb[0].mxu0
      %v1825 = vpop.f32.mrb[0].mxu0
      %v1826 = vadd.f32 0.0, %v1825
      %v1827 = vpop.f32.mrb[0].mxu0
      %1828 = vmatprep.mubr.bf16.mxu0 0
      %1829 = vmatmul.mubr.bf16.gmra.mrb[0].mxu0 %v1730
      %v1830 = vpop.f32.mrb[0].mxu0
      %v1831 = vadd.f32 0.0, %v1830
      %v1832 = vpop.f32.mrb[0].mxu0
      %v1833 = vpop.f32.mrb[0].mxu0
      %v1834 = vadd.f32 0.0, %v1833
      %v1835 = vpop.f32.mrb[0].mxu0
      %1836 = vmatprep.mubr.bf16.mxu0 0
      %1837 = vmatmul.mubr.bf16.gmra.mrb[0].mxu0 %v1733
      %v1838 = vpop.f32.mrb[0].mxu0
      %v1839 = vadd.f32 0.0, %v1838
      %v1840 = vpop.f32.mrb[0].mxu0
      %v1841 = vpop.f32.mrb[0].mxu0
      %v1842 = vadd.f32 0.0, %v1841
      %v1843 = vpop.f32.mrb[0].mxu0
      %1844 = vmatprep.mubr.bf16.mxu0 0
      %1845 = vmatmul.mubr.bf16.gmra.mrb[0].mxu0 %v1736
      %v1846 = vpop.f32.mrb[0].mxu0
      %v1847 = vadd.f32 0.0, %v1846
      %v1848 = vpop.f32.mrb[0].mxu0
      %v1849 = vpop.f32.mrb[0].mxu0
      %v1850 = vadd.f32 0.0, %v1849
      %v1851 = vpop.f32.mrb[0].mxu0
      %1852 = vmatprep.mubr.bf16.mxu0 0
      %1853 = vmatmul.mubr.bf16.gmra.mrb[0].mxu0 %v1739
      %v1854 = vpop.f32.mrb[0].mxu0
      %v1855 = vadd.f32 0.0, %v1854
      %v1856 = vpop.f32.mrb[0].mxu0
      %v1857 = vpop.f32.mrb[0].mxu0
      %v1858 = vadd.f32 0.0, %v1857
      %v1859 = vpop.f32.mrb[0].mxu0
      %1860 = vmatprep.mubr.bf16.mxu0 0
      %1861 = vmatmul.mubr.bf16.gmra.mrb[0].mxu0 %v1742
      %v1862 = vpop.f32.mrb[0].mxu0
      %v1863 = vadd.f32 0.0, %v1862
      %v1864 = vpop.f32.mrb[0].mxu0
      %v1865 = vpop.f32.mrb[0].mxu0
      %v1866 = vadd.f32 0.0, %v1865
      %v1867 = vpop.f32.mrb[0].mxu0
      %1868 = vmatprep.mubr.bf16.mxu0 0
      %1869 = vmatmul.mubr.bf16.gmra.mrb[0].mxu0 %v1745
      %v1870 = vpop.f32.mrb[0].mxu0
      %v1871 = vadd.f32 0.0, %v1870
      %v1872 = vpop.f32.mrb[0].mxu0
      %v1873 = vpop.f32.mrb[0].mxu0
      %v1874 = vadd.f32 0.0, %v1873
      %v1875 = vpop.f32.mrb[0].mxu0
      %1876 = vmatprep.mubr.bf16.mxu0 0
      %1877 = vmatmul.mubr.bf16.gmra.mrb[0].mxu0 %v1748
      %v1878 = vpop.f32.mrb[0].mxu0
      %v1879 = vadd.f32 0.0, %v1878
      %v1880 = vpop.f32.mrb[0].mxu0
      %v1881 = vpop.f32.mrb[0].mxu0
      %v1882 = vadd.f32 0.0, %v1881
      %v1883 = vpop.f32.mrb[0].mxu0
      %1884 = vmatprep.mubr.bf16.mxu0 0
      %1885 = vmatmul.mubr.bf16.gmra.mrb[0].mxu0 %v1751
      %v1886 = vpop.f32.mrb[0].mxu0
      %v1887 = vadd.f32 0.0, %v1886
      %v1888 = vpop.f32.mrb[0].mxu0
      %v1889 = vpop.f32.mrb[0].mxu0
      %v1890 = vadd.f32 0.0, %v1889
      %v1891 = vpop.f32.mrb[0].mxu0
      %1892 = vmatprep.mubr.bf16.mxu0 0
      %1893 = vmatmul.mubr.bf16.gmra.mrb[0].mxu0 %v1754
      %v1894 = vpop.f32.mrb[0].mxu0
      %v1895 = vadd.f32 0.0, %v1894
      %v1896 = vpop.f32.mrb[0].mxu0
      %v1897 = vpop.f32.mrb[0].mxu0
      %v1898 = vadd.f32 0.0, %v1897
      %v1899 = vpop.f32.mrb[0].mxu0
      %1900 = vmatprep.mubr.bf16.mxu0 0
      %1901 = vmatmul.mubr.bf16.gmra.mrb[0].mxu0 %v1757
      %v1902 = vpop.f32.mrb[0].mxu0
      %v1903 = vadd.f32 0.0, %v1902
      %v1904 = vpop.f32.mrb[0].mxu0
      %v1905 = vpop.f32.mrb[0].mxu0
      %v1906 = vadd.f32 0.0, %v1905
      %v1907 = vpop.f32.mrb[0].mxu0
      %1908 = vmatprep.mubr.bf16.mxu0 0
      %1909 = vmatmul.mubr.bf16.gmra.mrb[0].mxu0 %v1760
      %v1910 = vpop.f32.mrb[0].mxu0
      %v1911 = vadd.f32 0.0, %v1910
      %v1912 = vpop.f32.mrb[0].mxu0
      %v1913 = vpop.f32.mrb[0].mxu0
      %v1914 = vadd.f32 0.0, %v1913
      %v1915 = vpop.f32.mrb[0].mxu0
      %1916 = vmatprep.mubr.bf16.mxu0 0
      %1917 = vmatmul.mubr.bf16.gmra.mrb[0].mxu0 %v1763
      %v1918 = vpop.f32.mrb[0].mxu0
      %v1919 = vadd.f32 0.0, %v1918
      %v1920 = vpop.f32.mrb[0].mxu0
      %v1921 = vpop.f32.mrb[0].mxu0
      %v1922 = vadd.f32 0.0, %v1921
      %v1923 = vpop.f32.mrb[0].mxu0
      %1924 = vmatprep.mubr.bf16.mxu0 0
      %1925 = vmatmul.mubr.bf16.gmra.mrb[0].mxu0 %v1766
      %v1926 = vpop.f32.mrb[0].mxu0
      %v1927 = vadd.f32 0.0, %v1926
      %v1928 = vpop.f32.mrb[0].mxu0
      %v1929 = vpop.f32.mrb[0].mxu0
      %v1930 = vadd.f32 0.0, %v1929
      %v1931 = vpop.f32.mrb[0].mxu0
      %1932 = vdwg.mxu0
      %1933 = vst.msk [vmem:[%s150] sm:$0xff] %vm1502, %v1807
      %1934 = vst.msk [vmem:[%s150 + $0x8] sm:$0xff] %vm1502, %v1810
      %1935 = vst.msk [vmem:[%s150 + $0x10] sm:$0xff] %vm1502, %v1815
      %1936 = vst.msk [vmem:[%s150 + $0x18] sm:$0xff] %vm1502, %v1818
      %1937 = vst.msk [vmem:[%s150 + $0x20] sm:$0xff] %vm1502, %v1823
      %1938 = vst.msk [vmem:[%s150 + $0x28] sm:$0xff] %vm1502, %v1826
      %1939 = vst.msk [vmem:[%s150 + $0x30] sm:$0xff] %vm1502, %v1831
      %1940 = vst.msk [vmem:[%s150 + $0x38] sm:$0xff] %vm1502, %v1834
      %1941 = vst.msk [vmem:[%s150 + $0x40] sm:$0xff] %vm1502, %v1839
      %1942 = vst.msk [vmem:[%s150 + $0x48] sm:$0xff] %vm1502, %v1842
      %1943 = vst.msk [vmem:[%s150 + $0x50] sm:$0xff] %vm1502, %v1847
      %1944 = vst.msk [vmem:[%s150 + $0x58] sm:$0xff] %vm1502, %v1850
      %1945 = vst.msk [vmem:[%s150 + $0x60] sm:$0xff] %vm1502, %v1855
      %1946 = vst.msk [vmem:[%s150 + $0x68] sm:$0xff] %vm1502, %v1858
      %1947 = vst.msk [vmem:[%s150 + $0x70] sm:$0xff] %vm1502, %v1863
      %1948 = vst.msk [vmem:[%s150 + $0x78] sm:$0xff] %vm1502, %v1866
      %1949 = vst.msk [vmem:[%s150 + $0x80] sm:$0xff] %vm1502, %v1871
      %1950 = vst.msk [vmem:[%s150 + $0x88] sm:$0xff] %vm1502, %v1874
      %1951 = vst.msk [vmem:[%s150 + $0x90] sm:$0xff] %vm1502, %v1879
      %1952 = vst.msk [vmem:[%s150 + $0x98] sm:$0xff] %vm1502, %v1882
      %1953 = vst.msk [vmem:[%s150 + $0xa0] sm:$0xff] %vm1502, %v1887
      %1954 = vst.msk [vmem:[%s150 + $0xa8] sm:$0xff] %vm1502, %v1890
      %1955 = vst.msk [vmem:[%s150 + $0xb0] sm:$0xff] %vm1502, %v1895
      %1956 = vst.msk [vmem:[%s150 + $0xb8] sm:$0xff] %vm1502, %v1898
      %1957 = vst.msk [vmem:[%s150 + $0xc0] sm:$0xff] %vm1502, %v1903
      %1958 = vst.msk [vmem:[%s150 + $0xc8] sm:$0xff] %vm1502, %v1906
      %1959 = vst.msk [vmem:[%s150 + $0xd0] sm:$0xff] %vm1502, %v1911
      %1960 = vst.msk [vmem:[%s150 + $0xd8] sm:$0xff] %vm1502, %v1914
      %1961 = vst.msk [vmem:[%s150 + $0xe0] sm:$0xff] %vm1502, %v1919
      %1962 = vst.msk [vmem:[%s150 + $0xe8] sm:$0xff] %vm1502, %v1922
      %1963 = vst.msk [vmem:[%s150 + $0xf0] sm:$0xff] %vm1502, %v1927
      %1964 = vst.msk [vmem:[%s150 + $0xf8] sm:$0xff] %vm1502, %v1930
      %s1965 = smul.u32 4, %s13
      %p1966 = scmp.lt.s32.totalorder %s1965, 7
      %s1967 = scalar_select %p1966, %s1965, 7
      %s1968 = smul.addr %s1967, 8
      %s1969 = smul.addr %s1968, 8
      %s1970 = scalar_lea.vmem %s2, %s1969
      // Predicated region
      $region29: #{tpu_custom_call.1} parent=27 // pred_check
        %p1971 = pneg %p78
      $region30: #{tpu_custom_call.1} parent=27 // pred_check_branch
        %1973 = sbr.rel (%p1971) target = $region32
      $region31: #{tpu_custom_call.1} parent=27 // pred_region
        %s1974 = smul.u32 4, %s13
      $region32: #{tpu_custom_call.1} parent=27 // pred_fallthru
        _
    $region28: #{tpu_custom_call.1} parent=5 // pred_fallthru
      _
    %p1975 = scmp.le.s32.totalorder 2, %s8
    // Predicated region
    $region33: #{tpu_custom_call.1} parent=5 // pred_check
      %p1976 = pneg %p1975
    $region34: #{tpu_custom_call.1} parent=5 // pred_check_branch
      %1978 = sbr.rel (%p1976) target = $region36
    $region35: #{tpu_custom_call.1} parent=5 // pred_region
      %s1979 = ssub.s32 %s8, 2
      // Predicated region
      $region37: #{tpu_custom_call.1} parent=35 // pred_check
        %p1980 = pneg %p84
      $region38: #{tpu_custom_call.1} parent=35 // pred_check_branch
        %1982 = sbr.rel (%p1980) target = $region40
      $region39: #{tpu_custom_call.1} parent=35 // pred_region
        %s1983 = smul.u32 4, %s14
        %p1984 = scmp.lt.s32.totalorder %s1983, 7
        %s1985 = scalar_select %p1984, %s1983, 7
        %s1986 = smul.addr %s1985, 8
        %s1987 = smul.addr %s1986, 8
        %s1988 = scalar_lea.vmem %s2, %s1987
      $region40: #{tpu_custom_call.1} parent=35 // pred_fallthru
        _
    $region36: #{tpu_custom_call.1} parent=5 // pred_fallthru
      _
  $region6: #{tpu_custom_call.1} parent=0 // loop_footer
    %s12 = sadd.s32 1, %s8
  $region7: #{tpu_custom_call.1} parent=0 // loop_footer_branch
    %7 = sbr.rel target = $region3
  $region8: #{tpu_custom_call.1} parent=0 // loop_exit
    _

</llo_original>
